<compile_context>
chip_gen: v5e
topology: v5e:2x2
jax: 0.10.0
libtpu: 0.0.40
codegen_flags: <defaults>
</compile_context>

<pallas_src>
import functools

import jax
import jax.numpy as jnp
from jax.experimental import pallas as pl
from jax.experimental.pallas import tpu as pltpu


def _spatial_gate_kernel(x_ref, taps_ref, shift_ref, o_ref, pool_ref, attn_ref,
                         *, C, H, W, K, P, MT, Hs, Wb):
    """Fused SpatialGate for one batch element (flattened spatial layout).

    x_ref    : (1, C, H*W)    input feature map, lane-dense (VMEM)
    taps_ref : (K, 2*Wb, W)   channel-stacked banded Toeplitz taps, bf16 (VMEM)
    shift_ref: (1,)           folded BatchNorm shift (SMEM scalar)
    o_ref    : (1, C, H*W)    gated output, lane-dense (VMEM)
    pool_ref : (Hs, 2*Wb)     zero-margined ChannelPool conv scratch (VMEM f32)
    attn_ref : (1, H*W)       flattened attention map scratch (VMEM f32)
    """
    # ---- ChannelPool: vectorized max & mean over channels (no C loop) -------
    xv = x_ref[0].astype(jnp.float32)                        # (C, HW) lane-dense
    cmax = jnp.max(xv, axis=0, keepdims=True)                # (1, HW)
    cmean = jnp.sum(xv, axis=0, keepdims=True) * (1.0 / C)   # (1, HW)

    # ---- re-zero only the margin strips (pad rows / pad columns) ------------
    pool_ref[MT - P:MT, :] = jnp.zeros((P, 2 * Wb), jnp.float32)
    pool_ref[MT + H:MT + H + P, :] = jnp.zeros((P, 2 * Wb), jnp.float32)
    pool_ref[MT:MT + H, W:Wb] = jnp.zeros((H, Wb - W), jnp.float32)
    pool_ref[MT:MT + H, Wb + W:2 * Wb] = jnp.zeros((H, Wb - W), jnp.float32)

    # ---- relayout the tiny pooled maps: flat (1, HW) -> 2D conv scratch -----
    # (H small masked row stores; all C-sized traffic stays lane-dense.)
    for h in range(H):
        s = h * W
        pool_ref[MT + h:MT + h + 1, 0:W] = cmax[:, s:s + W]
        pool_ref[MT + h:MT + h + 1, Wb:Wb + W] = cmean[:, s:s + W]

    # ---- 7x7 conv + folded BN: K channel-stacked bf16 matmuls ---------------
    # One aligned load of the scratch; the vertical tap offset is a static
    # value slice of the f32 matmul output (no misaligned VMEM ref slices).
    pool_val = pool_ref[...].astype(jnp.bfloat16)            # (Hs, 2*Wb)
    acc = None
    for kh in range(K):
        full = jnp.dot(pool_val, taps_ref[kh],
                       preferred_element_type=jnp.float32)   # (Hs, W)
        r0 = MT + kh - P
        part = full[r0:r0 + H, :]                            # (H, W)
        acc = part if acc is None else acc + part

    # ---- sigmoid (SpatialGate's BasicConv has relu=False) on the EUP --------
    logits = acc + shift_ref[0]
    attn = pl.reciprocal(1.0 + jnp.exp(-logits), approx=True)  # (H, W)

    # ---- relayout attn back to the flat layout and gate (lane-dense) --------
    for h in range(H):
        s = h * W
        attn_ref[:, s:s + W] = attn[h:h + 1, :]
    o_ref[0] = (x_ref[0].astype(jnp.float32) * attn_ref[...]).astype(o_ref.dtype)


def spatial_gate(x, conv_w, bn_gamma, bn_beta, bn_mean, bn_var, *, eps=1e-5):
    """SpatialGate.forward: x * sigmoid(BN(Conv7x7(ChannelPool(x)))).

    BatchNorm2d is applied in inference form (running statistics + affine),
    folded into the conv weights and a scalar shift.
    """
    N, C, H, W = x.shape
    Cout, Cin, KH, KW = conv_w.shape
    assert (Cout, Cin) == (1, 2) and KH == KW, "SpatialGate conv must be (1, 2, k, k)"
    K = KH
    P = (K - 1) // 2
    HW = H * W

    # ---- fold inference BatchNorm into the conv weights + a scalar shift ----
    inv_std = (bn_gamma / jnp.sqrt(bn_var + eps)).astype(jnp.float32)      # (1,)
    w_folded = conv_w[0].astype(jnp.float32) * inv_std[0]                  # (2, K, K)
    shift = (bn_beta - bn_mean * inv_std).astype(jnp.float32)              # (1,)

    # ---- channel-stacked banded Toeplitz taps (bf16 MXU operands) -----------
    # taps[kh, j_in, j_out] = w_folded[c, kh, j_in - j_out + P] inside the band
    # (channel c stacked along the contraction dim), 0 elsewhere.  Left zero
    # padding comes from band clipping; right padding from the zeroed scratch
    # columns [W, W+P).
    Wb = ((W + P + 127) // 128) * 128
    j_in = jnp.arange(Wb)[:, None]
    j_out = jnp.arange(W)[None, :]
    kw_idx = j_in - j_out + P                                              # (Wb, W)
    valid = ((kw_idx >= 0) & (kw_idx < K)).astype(jnp.float32)
    band = jnp.take(w_folded, jnp.clip(kw_idx, 0, K - 1), axis=2) * valid  # (2, K, Wb, W)
    taps = jnp.concatenate([band[0], band[1]], axis=1).astype(jnp.bfloat16)  # (K, 2*Wb, W)

    MT = 8                                        # sublane-aligned interior start
    Hs = ((MT + H + P + 7) // 8) * 8              # bottom margin >= P

    x_flat = x.reshape(N, C, HW)                  # free for contiguous NCHW

    kernel = functools.partial(_spatial_gate_kernel,
                               C=C, H=H, W=W, K=K, P=P, MT=MT, Hs=Hs, Wb=Wb)

    # ---- generation-aware VMEM budget (no artificial 48 MiB clamp) ----------
    itemsize = jnp.dtype(x.dtype).itemsize
    need = (2 * 2 * C * HW * itemsize             # x + out blocks, double-buffered
            + 2 * K * 2 * Wb * W * 2              # bf16 taps, double-buffered
            + Hs * 2 * Wb * 4 + HW * 4            # conv + attn scratch
            + (2 << 20))                          # headroom
    cap = 128 * 1024 * 1024
    try:
        cap = int(getattr(pltpu.get_tpu_info(), "vmem_capacity_bytes", cap))
    except Exception:
        pass
    vmem_limit = int(min(max(need, 8 * 1024 * 1024), int(cap * 0.9)))

    out_flat = pl.pallas_call(
        kernel,
        out_shape=jax.ShapeDtypeStruct((N, C, HW), x.dtype),
        grid_spec=pltpu.PrefetchScalarGridSpec(
            num_scalar_prefetch=0,
            grid=(N,),
            in_specs=[
                pl.BlockSpec((1, C, HW), lambda n: (n, 0, 0)),
                pl.BlockSpec((K, 2 * Wb, W), lambda n: (0, 0, 0)),
                pl.BlockSpec(memory_space=pltpu.MemorySpace.SMEM),
            ],
            out_specs=pl.BlockSpec((1, C, HW), lambda n: (n, 0, 0)),
            scratch_shapes=[pltpu.VMEM((Hs, 2 * Wb), jnp.float32),
                            pltpu.VMEM((1, HW), jnp.float32)],
        ),
        compiler_params=pltpu.CompilerParams(
            dimension_semantics=("parallel",),
            vmem_limit_bytes=vmem_limit),
    )(x_flat, taps, shift)
    return out_flat.reshape(N, C, H, W)


def _reference(x, conv_w, gamma, beta, mean, var, *, eps=1e-5):
    """Pure-JAX SpatialGate reference (inference BatchNorm)."""
    cmax = jnp.max(x, axis=1, keepdims=True)
    cmean = jnp.mean(x, axis=1, keepdims=True)
    pooled = jnp.concatenate([cmax, cmean], axis=1)                 # (N, 2, H, W)
    P = (conv_w.shape[-1] - 1) // 2
    y = jax.lax.conv_general_dilated(
        pooled.astype(jnp.float32), conv_w.astype(jnp.float32),
        window_strides=(1, 1), padding=[(P, P), (P, P)],
        dimension_numbers=("NCHW", "OIHW", "NCHW"))
    inv = gamma / jnp.sqrt(var + eps)
    y = y * inv.reshape(1, -1, 1, 1) + (beta - mean * inv).reshape(1, -1, 1, 1)
    return x * jax.nn.sigmoid(y)


if __name__ == "__main__":
    # SpatialGate on a small NCHW feature map.
    N, C, H, W = 2, 4, 16, 16
    K = 7

    key = jax.random.PRNGKey(0)
    kx, kconv, kg, kb, km, kv = jax.random.split(key, 6)
    x = jax.random.normal(kx, (N, C, H, W), dtype=jnp.float32)
    conv_w = jax.random.normal(kconv, (1, 2, K, K), dtype=jnp.float32) * 0.1
    gamma = jax.random.normal(kg, (1,), dtype=jnp.float32) * 0.1 + 1.0
    beta = jax.random.normal(kb, (1,), dtype=jnp.float32) * 0.1
    running_mean = jax.random.normal(km, (1,), dtype=jnp.float32) * 0.1
    running_var = jax.nn.softplus(jax.random.normal(kv, (1,), dtype=jnp.float32)) + 0.5

    out = spatial_gate(x, conv_w, gamma, beta, running_mean, running_var)
    out = jax.block_until_ready(out)

    ref = _reference(x, conv_w, gamma, beta, running_mean, running_var)
    assert out.shape == (N, C, H, W), out.shape
    max_err = float(jnp.max(jnp.abs(out - ref)))
    # Tolerance allows for the bf16 MXU operands + approx EUP reciprocal vs the
    # all-f32 XLA conv reference.
    assert jnp.allclose(out, ref, atol=2e-2, rtol=2e-2), max_err
    print("KERNEL_OK")
</pallas_src>

<mosaic_0001>
module attributes {stable_mosaic.version = 11 : i64} {
  func.func @_spatial_gate_kernel(%arg0: i32, %arg1: memref<1x4x256xf32, #tpu.memory_space<vmem>>, %arg2: memref<7x256x16xbf16, #tpu.memory_space<vmem>>, %arg3: memref<1xf32, #tpu.memory_space<smem>>, %arg4: memref<1x4x256xf32, #tpu.memory_space<vmem>>, %arg5: memref<32x256xf32, #tpu.memory_space<vmem>>, %arg6: memref<1x256xf32, #tpu.memory_space<vmem>>) attributes {dimension_semantics = [#tpu.dimension_semantics<parallel>], iteration_bounds = array<i64: 2>, scalar_prefetch = 0 : i64, scratch_operands = 2 : i64, tpu.core_type = #tpu.core_type<tc>, window_params = [{transform_indices = @transform_0, window_bounds = array<i64: 1, 4, 256>}, {pipeline_mode = #tpu.pipeline_mode<synchronous>, transform_indices = @transform_1, window_bounds = array<i64: 7, 256, 16>}, {transform_indices = @transform_2, window_bounds = array<i64: 1>}, {transform_indices = @transform_3, window_bounds = array<i64: 1, 4, 256>}]} {
    %c0 = arith.constant 0 : index
    %c0_0 = arith.constant 0 : index
    %c0_1 = arith.constant 0 : index
    %0 = vector.load %arg1[%c0, %c0_0, %c0_1] : memref<1x4x256xf32, #tpu.memory_space<vmem>>, vector<1x4x256xf32>
    %1 = vector.shape_cast %0 : vector<1x4x256xf32> to vector<4x256xf32>
    %cst = arith.constant dense<0xFF800000> : vector<256xf32>
    %2 = vector.multi_reduction <maximumf>, %1, %cst [0] : vector<4x256xf32> to vector<256xf32>
    %3 = vector.shape_cast %2 : vector<256xf32> to vector<1x256xf32>
    %cst_2 = arith.constant dense<0.000000e+00> : vector<256xf32>
    %4 = vector.multi_reduction <add>, %1, %cst_2 [0] : vector<4x256xf32> to vector<256xf32>
    %5 = vector.shape_cast %4 : vector<256xf32> to vector<1x256xf32>
    %cst_3 = arith.constant 2.500000e-01 : f32
    %6 = vector.broadcast %cst_3 : f32 to vector<1x256xf32>
    %7 = arith.mulf %5, %6 : vector<1x256xf32>
    %cst_4 = arith.constant 0.000000e+00 : f32
    %8 = vector.broadcast %cst_4 : f32 to vector<3x256xf32>
    %c5 = arith.constant 5 : index
    %c0_5 = arith.constant 0 : index
    %9 = vector.load %arg5[%c5, %c0_5] : memref<32x256xf32, #tpu.memory_space<vmem>>, vector<3x256xf32>
    tpu.vector_store %arg5[%c5, %c0_5], %8 {strides = array<i32>} : memref<32x256xf32, #tpu.memory_space<vmem>>, vector<3x256xf32>,
    %cst_6 = arith.constant 0.000000e+00 : f32
    %10 = vector.broadcast %cst_6 : f32 to vector<3x256xf32>
    %c24 = arith.constant 24 : index
    %c0_7 = arith.constant 0 : index
    %11 = vector.load %arg5[%c24, %c0_7] : memref<32x256xf32, #tpu.memory_space<vmem>>, vector<3x256xf32>
    tpu.vector_store %arg5[%c24, %c0_7], %10 {strides = array<i32>} : memref<32x256xf32, #tpu.memory_space<vmem>>, vector<3x256xf32>,
    %cst_8 = arith.constant 0.000000e+00 : f32
    %12 = vector.broadcast %cst_8 : f32 to vector<16x112xf32>
    %c8 = arith.constant 8 : index
    %c16 = arith.constant 16 : index
    %13 = vector.load %arg5[%c8, %c16] : memref<32x256xf32, #tpu.memory_space<vmem>>, vector<16x112xf32>
    tpu.vector_store %arg5[%c8, %c16], %12 {strides = array<i32>} : memref<32x256xf32, #tpu.memory_space<vmem>>, vector<16x112xf32>,
    %cst_9 = arith.constant 0.000000e+00 : f32
    %14 = vector.broadcast %cst_9 : f32 to vector<16x112xf32>
    %c8_10 = arith.constant 8 : index
    %c144 = arith.constant 144 : index
    %15 = vector.load %arg5[%c8_10, %c144] : memref<32x256xf32, #tpu.memory_space<vmem>>, vector<16x112xf32>
    tpu.vector_store %arg5[%c8_10, %c144], %14 {strides = array<i32>} : memref<32x256xf32, #tpu.memory_space<vmem>>, vector<16x112xf32>,
    %16 = vector.extract_strided_slice %3 {offsets = [0, 0], sizes = [1, 16], strides = [1, 1]} : vector<1x256xf32> to vector<1x16xf32>
    %c8_11 = arith.constant 8 : index
    %c0_12 = arith.constant 0 : index
    %17 = vector.load %arg5[%c8_11, %c0_12] : memref<32x256xf32, #tpu.memory_space<vmem>>, vector<1x16xf32>
    tpu.vector_store %arg5[%c8_11, %c0_12], %16 {strides = array<i32>} : memref<32x256xf32, #tpu.memory_space<vmem>>, vector<1x16xf32>,
    %18 = vector.extract_strided_slice %7 {offsets = [0, 0], sizes = [1, 16], strides = [1, 1]} : vector<1x256xf32> to vector<1x16xf32>
    %c8_13 = arith.constant 8 : index
    %c128 = arith.constant 128 : index
    %19 = vector.load %arg5[%c8_13, %c128] : memref<32x256xf32, #tpu.memory_space<vmem>>, vector<1x16xf32>
    tpu.vector_store %arg5[%c8_13, %c128], %18 {strides = array<i32>} : memref<32x256xf32, #tpu.memory_space<vmem>>, vector<1x16xf32>,
    %20 = vector.extract_strided_slice %3 {offsets = [0, 16], sizes = [1, 16], strides = [1, 1]} : vector<1x256xf32> to vector<1x16xf32>
    %c9 = arith.constant 9 : index
    %c0_14 = arith.constant 0 : index
    %21 = vector.load %arg5[%c9, %c0_14] : memref<32x256xf32, #tpu.memory_space<vmem>>, vector<1x16xf32>
    tpu.vector_store %arg5[%c9, %c0_14], %20 {strides = array<i32>} : memref<32x256xf32, #tpu.memory_space<vmem>>, vector<1x16xf32>,
    %22 = vector.extract_strided_slice %7 {offsets = [0, 16], sizes = [1, 16], strides = [1, 1]} : vector<1x256xf32> to vector<1x16xf32>
    %c9_15 = arith.constant 9 : index
    %c128_16 = arith.constant 128 : index
    %23 = vector.load %arg5[%c9_15, %c128_16] : memref<32x256xf32, #tpu.memory_space<vmem>>, vector<1x16xf32>
    tpu.vector_store %arg5[%c9_15, %c128_16], %22 {strides = array<i32>} : memref<32x256xf32, #tpu.memory_space<vmem>>, vector<1x16xf32>,
    %24 = vector.extract_strided_slice %3 {offsets = [0, 32], sizes = [1, 16], strides = [1, 1]} : vector<1x256xf32> to vector<1x16xf32>
    %c10 = arith.constant 10 : index
    %c0_17 = arith.constant 0 : index
    %25 = vector.load %arg5[%c10, %c0_17] : memref<32x256xf32, #tpu.memory_space<vmem>>, vector<1x16xf32>
    tpu.vector_store %arg5[%c10, %c0_17], %24 {strides = array<i32>} : memref<32x256xf32, #tpu.memory_space<vmem>>, vector<1x16xf32>,
    %26 = vector.extract_strided_slice %7 {offsets = [0, 32], sizes = [1, 16], strides = [1, 1]} : vector<1x256xf32> to vector<1x16xf32>
    %c10_18 = arith.constant 10 : index
    %c128_19 = arith.constant 128 : index
    %27 = vector.load %arg5[%c10_18, %c128_19] : memref<32x256xf32, #tpu.memory_space<vmem>>, vector<1x16xf32>
    tpu.vector_store %arg5[%c10_18, %c128_19], %26 {strides = array<i32>} : memref<32x256xf32, #tpu.memory_space<vmem>>, vector<1x16xf32>,
    %28 = vector.extract_strided_slice %3 {offsets = [0, 48], sizes = [1, 16], strides = [1, 1]} : vector<1x256xf32> to vector<1x16xf32>
    %c11 = arith.constant 11 : index
    %c0_20 = arith.constant 0 : index
    %29 = vector.load %arg5[%c11, %c0_20] : memref<32x256xf32, #tpu.memory_space<vmem>>, vector<1x16xf32>
    tpu.vector_store %arg5[%c11, %c0_20], %28 {strides = array<i32>} : memref<32x256xf32, #tpu.memory_space<vmem>>, vector<1x16xf32>,
    %30 = vector.extract_strided_slice %7 {offsets = [0, 48], sizes = [1, 16], strides = [1, 1]} : vector<1x256xf32> to vector<1x16xf32>
    %c11_21 = arith.constant 11 : index
    %c128_22 = arith.constant 128 : index
    %31 = vector.load %arg5[%c11_21, %c128_22] : memref<32x256xf32, #tpu.memory_space<vmem>>, vector<1x16xf32>
    tpu.vector_store %arg5[%c11_21, %c128_22], %30 {strides = array<i32>} : memref<32x256xf32, #tpu.memory_space<vmem>>, vector<1x16xf32>,
    %32 = vector.extract_strided_slice %3 {offsets = [0, 64], sizes = [1, 16], strides = [1, 1]} : vector<1x256xf32> to vector<1x16xf32>
    %c12 = arith.constant 12 : index
    %c0_23 = arith.constant 0 : index
    %33 = vector.load %arg5[%c12, %c0_23] : memref<32x256xf32, #tpu.memory_space<vmem>>, vector<1x16xf32>
    tpu.vector_store %arg5[%c12, %c0_23], %32 {strides = array<i32>} : memref<32x256xf32, #tpu.memory_space<vmem>>, vector<1x16xf32>,
    %34 = vector.extract_strided_slice %7 {offsets = [0, 64], sizes = [1, 16], strides = [1, 1]} : vector<1x256xf32> to vector<1x16xf32>
    %c12_24 = arith.constant 12 : index
    %c128_25 = arith.constant 128 : index
    %35 = vector.load %arg5[%c12_24, %c128_25] : memref<32x256xf32, #tpu.memory_space<vmem>>, vector<1x16xf32>
    tpu.vector_store %arg5[%c12_24, %c128_25], %34 {strides = array<i32>} : memref<32x256xf32, #tpu.memory_space<vmem>>, vector<1x16xf32>,
    %36 = vector.extract_strided_slice %3 {offsets = [0, 80], sizes = [1, 16], strides = [1, 1]} : vector<1x256xf32> to vector<1x16xf32>
    %c13 = arith.constant 13 : index
    %c0_26 = arith.constant 0 : index
    %37 = vector.load %arg5[%c13, %c0_26] : memref<32x256xf32, #tpu.memory_space<vmem>>, vector<1x16xf32>
    tpu.vector_store %arg5[%c13, %c0_26], %36 {strides = array<i32>} : memref<32x256xf32, #tpu.memory_space<vmem>>, vector<1x16xf32>,
    %38 = vector.extract_strided_slice %7 {offsets = [0, 80], sizes = [1, 16], strides = [1, 1]} : vector<1x256xf32> to vector<1x16xf32>
    %c13_27 = arith.constant 13 : index
    %c128_28 = arith.constant 128 : index
    %39 = vector.load %arg5[%c13_27, %c128_28] : memref<32x256xf32, #tpu.memory_space<vmem>>, vector<1x16xf32>
    tpu.vector_store %arg5[%c13_27, %c128_28], %38 {strides = array<i32>} : memref<32x256xf32, #tpu.memory_space<vmem>>, vector<1x16xf32>,
    %40 = vector.extract_strided_slice %3 {offsets = [0, 96], sizes = [1, 16], strides = [1, 1]} : vector<1x256xf32> to vector<1x16xf32>
    %c14 = arith.constant 14 : index
    %c0_29 = arith.constant 0 : index
    %41 = vector.load %arg5[%c14, %c0_29] : memref<32x256xf32, #tpu.memory_space<vmem>>, vector<1x16xf32>
    tpu.vector_store %arg5[%c14, %c0_29], %40 {strides = array<i32>} : memref<32x256xf32, #tpu.memory_space<vmem>>, vector<1x16xf32>,
    %42 = vector.extract_strided_slice %7 {offsets = [0, 96], sizes = [1, 16], strides = [1, 1]} : vector<1x256xf32> to vector<1x16xf32>
    %c14_30 = arith.constant 14 : index
    %c128_31 = arith.constant 128 : index
    %43 = vector.load %arg5[%c14_30, %c128_31] : memref<32x256xf32, #tpu.memory_space<vmem>>, vector<1x16xf32>
    tpu.vector_store %arg5[%c14_30, %c128_31], %42 {strides = array<i32>} : memref<32x256xf32, #tpu.memory_space<vmem>>, vector<1x16xf32>,
    %44 = vector.extract_strided_slice %3 {offsets = [0, 112], sizes = [1, 16], strides = [1, 1]} : vector<1x256xf32> to vector<1x16xf32>
    %c15 = arith.constant 15 : index
    %c0_32 = arith.constant 0 : index
    %45 = vector.load %arg5[%c15, %c0_32] : memref<32x256xf32, #tpu.memory_space<vmem>>, vector<1x16xf32>
    tpu.vector_store %arg5[%c15, %c0_32], %44 {strides = array<i32>} : memref<32x256xf32, #tpu.memory_space<vmem>>, vector<1x16xf32>,
    %46 = vector.extract_strided_slice %7 {offsets = [0, 112], sizes = [1, 16], strides = [1, 1]} : vector<1x256xf32> to vector<1x16xf32>
    %c15_33 = arith.constant 15 : index
    %c128_34 = arith.constant 128 : index
    %47 = vector.load %arg5[%c15_33, %c128_34] : memref<32x256xf32, #tpu.memory_space<vmem>>, vector<1x16xf32>
    tpu.vector_store %arg5[%c15_33, %c128_34], %46 {strides = array<i32>} : memref<32x256xf32, #tpu.memory_space<vmem>>, vector<1x16xf32>,
    %48 = vector.extract_strided_slice %3 {offsets = [0, 128], sizes = [1, 16], strides = [1, 1]} : vector<1x256xf32> to vector<1x16xf32>
    %c16_35 = arith.constant 16 : index
    %c0_36 = arith.constant 0 : index
    %49 = vector.load %arg5[%c16_35, %c0_36] : memref<32x256xf32, #tpu.memory_space<vmem>>, vector<1x16xf32>
    tpu.vector_store %arg5[%c16_35, %c0_36], %48 {strides = array<i32>} : memref<32x256xf32, #tpu.memory_space<vmem>>, vector<1x16xf32>,
    %50 = vector.extract_strided_slice %7 {offsets = [0, 128], sizes = [1, 16], strides = [1, 1]} : vector<1x256xf32> to vector<1x16xf32>
    %c16_37 = arith.constant 16 : index
    %c128_38 = arith.constant 128 : index
    %51 = vector.load %arg5[%c16_37, %c128_38] : memref<32x256xf32, #tpu.memory_space<vmem>>, vector<1x16xf32>
    tpu.vector_store %arg5[%c16_37, %c128_38], %50 {strides = array<i32>} : memref<32x256xf32, #tpu.memory_space<vmem>>, vector<1x16xf32>,
    %52 = vector.extract_strided_slice %3 {offsets = [0, 144], sizes = [1, 16], strides = [1, 1]} : vector<1x256xf32> to vector<1x16xf32>
    %c17 = arith.constant 17 : index
    %c0_39 = arith.constant 0 : index
    %53 = vector.load %arg5[%c17, %c0_39] : memref<32x256xf32, #tpu.memory_space<vmem>>, vector<1x16xf32>
    tpu.vector_store %arg5[%c17, %c0_39], %52 {strides = array<i32>} : memref<32x256xf32, #tpu.memory_space<vmem>>, vector<1x16xf32>,
    %54 = vector.extract_strided_slice %7 {offsets = [0, 144], sizes = [1, 16], strides = [1, 1]} : vector<1x256xf32> to vector<1x16xf32>
    %c17_40 = arith.constant 17 : index
    %c128_41 = arith.constant 128 : index
    %55 = vector.load %arg5[%c17_40, %c128_41] : memref<32x256xf32, #tpu.memory_space<vmem>>, vector<1x16xf32>
    tpu.vector_store %arg5[%c17_40, %c128_41], %54 {strides = array<i32>} : memref<32x256xf32, #tpu.memory_space<vmem>>, vector<1x16xf32>,
    %56 = vector.extract_strided_slice %3 {offsets = [0, 160], sizes = [1, 16], strides = [1, 1]} : vector<1x256xf32> to vector<1x16xf32>
    %c18 = arith.constant 18 : index
    %c0_42 = arith.constant 0 : index
    %57 = vector.load %arg5[%c18, %c0_42] : memref<32x256xf32, #tpu.memory_space<vmem>>, vector<1x16xf32>
    tpu.vector_store %arg5[%c18, %c0_42], %56 {strides = array<i32>} : memref<32x256xf32, #tpu.memory_space<vmem>>, vector<1x16xf32>,
    %58 = vector.extract_strided_slice %7 {offsets = [0, 160], sizes = [1, 16], strides = [1, 1]} : vector<1x256xf32> to vector<1x16xf32>
    %c18_43 = arith.constant 18 : index
    %c128_44 = arith.constant 128 : index
    %59 = vector.load %arg5[%c18_43, %c128_44] : memref<32x256xf32, #tpu.memory_space<vmem>>, vector<1x16xf32>
    tpu.vector_store %arg5[%c18_43, %c128_44], %58 {strides = array<i32>} : memref<32x256xf32, #tpu.memory_space<vmem>>, vector<1x16xf32>,
    %60 = vector.extract_strided_slice %3 {offsets = [0, 176], sizes = [1, 16], strides = [1, 1]} : vector<1x256xf32> to vector<1x16xf32>
    %c19 = arith.constant 19 : index
    %c0_45 = arith.constant 0 : index
    %61 = vector.load %arg5[%c19, %c0_45] : memref<32x256xf32, #tpu.memory_space<vmem>>, vector<1x16xf32>
    tpu.vector_store %arg5[%c19, %c0_45], %60 {strides = array<i32>} : memref<32x256xf32, #tpu.memory_space<vmem>>, vector<1x16xf32>,
    %62 = vector.extract_strided_slice %7 {offsets = [0, 176], sizes = [1, 16], strides = [1, 1]} : vector<1x256xf32> to vector<1x16xf32>
    %c19_46 = arith.constant 19 : index
    %c128_47 = arith.constant 128 : index
    %63 = vector.load %arg5[%c19_46, %c128_47] : memref<32x256xf32, #tpu.memory_space<vmem>>, vector<1x16xf32>
    tpu.vector_store %arg5[%c19_46, %c128_47], %62 {strides = array<i32>} : memref<32x256xf32, #tpu.memory_space<vmem>>, vector<1x16xf32>,
    %64 = vector.extract_strided_slice %3 {offsets = [0, 192], sizes = [1, 16], strides = [1, 1]} : vector<1x256xf32> to vector<1x16xf32>
    %c20 = arith.constant 20 : index
    %c0_48 = arith.constant 0 : index
    %65 = vector.load %arg5[%c20, %c0_48] : memref<32x256xf32, #tpu.memory_space<vmem>>, vector<1x16xf32>
    tpu.vector_store %arg5[%c20, %c0_48], %64 {strides = array<i32>} : memref<32x256xf32, #tpu.memory_space<vmem>>, vector<1x16xf32>,
    %66 = vector.extract_strided_slice %7 {offsets = [0, 192], sizes = [1, 16], strides = [1, 1]} : vector<1x256xf32> to vector<1x16xf32>
    %c20_49 = arith.constant 20 : index
    %c128_50 = arith.constant 128 : index
    %67 = vector.load %arg5[%c20_49, %c128_50] : memref<32x256xf32, #tpu.memory_space<vmem>>, vector<1x16xf32>
    tpu.vector_store %arg5[%c20_49, %c128_50], %66 {strides = array<i32>} : memref<32x256xf32, #tpu.memory_space<vmem>>, vector<1x16xf32>,
    %68 = vector.extract_strided_slice %3 {offsets = [0, 208], sizes = [1, 16], strides = [1, 1]} : vector<1x256xf32> to vector<1x16xf32>
    %c21 = arith.constant 21 : index
    %c0_51 = arith.constant 0 : index
    %69 = vector.load %arg5[%c21, %c0_51] : memref<32x256xf32, #tpu.memory_space<vmem>>, vector<1x16xf32>
    tpu.vector_store %arg5[%c21, %c0_51], %68 {strides = array<i32>} : memref<32x256xf32, #tpu.memory_space<vmem>>, vector<1x16xf32>,
    %70 = vector.extract_strided_slice %7 {offsets = [0, 208], sizes = [1, 16], strides = [1, 1]} : vector<1x256xf32> to vector<1x16xf32>
    %c21_52 = arith.constant 21 : index
    %c128_53 = arith.constant 128 : index
    %71 = vector.load %arg5[%c21_52, %c128_53] : memref<32x256xf32, #tpu.memory_space<vmem>>, vector<1x16xf32>
    tpu.vector_store %arg5[%c21_52, %c128_53], %70 {strides = array<i32>} : memref<32x256xf32, #tpu.memory_space<vmem>>, vector<1x16xf32>,
    %72 = vector.extract_strided_slice %3 {offsets = [0, 224], sizes = [1, 16], strides = [1, 1]} : vector<1x256xf32> to vector<1x16xf32>
    %c22 = arith.constant 22 : index
    %c0_54 = arith.constant 0 : index
    %73 = vector.load %arg5[%c22, %c0_54] : memref<32x256xf32, #tpu.memory_space<vmem>>, vector<1x16xf32>
    tpu.vector_store %arg5[%c22, %c0_54], %72 {strides = array<i32>} : memref<32x256xf32, #tpu.memory_space<vmem>>, vector<1x16xf32>,
    %74 = vector.extract_strided_slice %7 {offsets = [0, 224], sizes = [1, 16], strides = [1, 1]} : vector<1x256xf32> to vector<1x16xf32>
    %c22_55 = arith.constant 22 : index
    %c128_56 = arith.constant 128 : index
    %75 = vector.load %arg5[%c22_55, %c128_56] : memref<32x256xf32, #tpu.memory_space<vmem>>, vector<1x16xf32>
    tpu.vector_store %arg5[%c22_55, %c128_56], %74 {strides = array<i32>} : memref<32x256xf32, #tpu.memory_space<vmem>>, vector<1x16xf32>,
    %76 = vector.extract_strided_slice %3 {offsets = [0, 240], sizes = [1, 16], strides = [1, 1]} : vector<1x256xf32> to vector<1x16xf32>
    %c23 = arith.constant 23 : index
    %c0_57 = arith.constant 0 : index
    %77 = vector.load %arg5[%c23, %c0_57] : memref<32x256xf32, #tpu.memory_space<vmem>>, vector<1x16xf32>
    tpu.vector_store %arg5[%c23, %c0_57], %76 {strides = array<i32>} : memref<32x256xf32, #tpu.memory_space<vmem>>, vector<1x16xf32>,
    %78 = vector.extract_strided_slice %7 {offsets = [0, 240], sizes = [1, 16], strides = [1, 1]} : vector<1x256xf32> to vector<1x16xf32>
    %c23_58 = arith.constant 23 : index
    %c128_59 = arith.constant 128 : index
    %79 = vector.load %arg5[%c23_58, %c128_59] : memref<32x256xf32, #tpu.memory_space<vmem>>, vector<1x16xf32>
    tpu.vector_store %arg5[%c23_58, %c128_59], %78 {strides = array<i32>} : memref<32x256xf32, #tpu.memory_space<vmem>>, vector<1x16xf32>,
    %c0_60 = arith.constant 0 : index
    %c0_61 = arith.constant 0 : index
    %80 = vector.load %arg5[%c0_60, %c0_61] : memref<32x256xf32, #tpu.memory_space<vmem>>, vector<32x256xf32>
    %81 = arith.truncf %80 : vector<32x256xf32> to vector<32x256xbf16>
    %c0_62 = arith.constant 0 : index
    %c0_63 = arith.constant 0 : index
    %c0_64 = arith.constant 0 : index
    %82 = vector.load %arg2[%c0_62, %c0_63, %c0_64] : memref<7x256x16xbf16, #tpu.memory_space<vmem>>, vector<1x256x16xbf16>
    %83 = vector.shape_cast %82 : vector<1x256x16xbf16> to vector<256x16xbf16>
    %cst_65 = arith.constant dense<0.000000e+00> : vector<32x16xf32>
    %84 = tpu.matmul %81, %83, %cst_65 {dimension_numbers = #tpu.dot_dimension_numbers<[1], [0], [0], [1], [0, 0, 1, 1], [], []>} : vector<32x256xbf16>, vector<256x16xbf16>, vector<32x16xf32> -> vector<32x16xf32>
    %85 = vector.extract_strided_slice %84 {offsets = [5, 0], sizes = [16, 16], strides = [1, 1]} : vector<32x16xf32> to vector<16x16xf32>
    %c1 = arith.constant 1 : index
    %c0_66 = arith.constant 0 : index
    %c0_67 = arith.constant 0 : index
    %86 = vector.load %arg2[%c1, %c0_66, %c0_67] : memref<7x256x16xbf16, #tpu.memory_space<vmem>>, vector<1x256x16xbf16>
    %87 = vector.shape_cast %86 : vector<1x256x16xbf16> to vector<256x16xbf16>
    %cst_68 = arith.constant dense<0.000000e+00> : vector<32x16xf32>
    %88 = tpu.matmul %81, %87, %cst_68 {dimension_numbers = #tpu.dot_dimension_numbers<[1], [0], [0], [1], [0, 0, 1, 1], [], []>} : vector<32x256xbf16>, vector<256x16xbf16>, vector<32x16xf32> -> vector<32x16xf32>
    %89 = vector.extract_strided_slice %88 {offsets = [6, 0], sizes = [16, 16], strides = [1, 1]} : vector<32x16xf32> to vector<16x16xf32>
    %90 = arith.addf %85, %89 : vector<16x16xf32>
    %c2 = arith.constant 2 : index
    %c0_69 = arith.constant 0 : index
    %c0_70 = arith.constant 0 : index
    %91 = vector.load %arg2[%c2, %c0_69, %c0_70] : memref<7x256x16xbf16, #tpu.memory_space<vmem>>, vector<1x256x16xbf16>
    %92 = vector.shape_cast %91 : vector<1x256x16xbf16> to vector<256x16xbf16>
    %cst_71 = arith.constant dense<0.000000e+00> : vector<32x16xf32>
    %93 = tpu.matmul %81, %92, %cst_71 {dimension_numbers = #tpu.dot_dimension_numbers<[1], [0], [0], [1], [0, 0, 1, 1], [], []>} : vector<32x256xbf16>, vector<256x16xbf16>, vector<32x16xf32> -> vector<32x16xf32>
    %94 = vector.extract_strided_slice %93 {offsets = [7, 0], sizes = [16, 16], strides = [1, 1]} : vector<32x16xf32> to vector<16x16xf32>
    %95 = arith.addf %90, %94 : vector<16x16xf32>
    %c3 = arith.constant 3 : index
    %c0_72 = arith.constant 0 : index
    %c0_73 = arith.constant 0 : index
    %96 = vector.load %arg2[%c3, %c0_72, %c0_73] : memref<7x256x16xbf16, #tpu.memory_space<vmem>>, vector<1x256x16xbf16>
    %97 = vector.shape_cast %96 : vector<1x256x16xbf16> to vector<256x16xbf16>
    %cst_74 = arith.constant dense<0.000000e+00> : vector<32x16xf32>
    %98 = tpu.matmul %81, %97, %cst_74 {dimension_numbers = #tpu.dot_dimension_numbers<[1], [0], [0], [1], [0, 0, 1, 1], [], []>} : vector<32x256xbf16>, vector<256x16xbf16>, vector<32x16xf32> -> vector<32x16xf32>
    %99 = vector.extract_strided_slice %98 {offsets = [8, 0], sizes = [16, 16], strides = [1, 1]} : vector<32x16xf32> to vector<16x16xf32>
    %100 = arith.addf %95, %99 : vector<16x16xf32>
    %c4 = arith.constant 4 : index
    %c0_75 = arith.constant 0 : index
    %c0_76 = arith.constant 0 : index
    %101 = vector.load %arg2[%c4, %c0_75, %c0_76] : memref<7x256x16xbf16, #tpu.memory_space<vmem>>, vector<1x256x16xbf16>
    %102 = vector.shape_cast %101 : vector<1x256x16xbf16> to vector<256x16xbf16>
    %cst_77 = arith.constant dense<0.000000e+00> : vector<32x16xf32>
    %103 = tpu.matmul %81, %102, %cst_77 {dimension_numbers = #tpu.dot_dimension_numbers<[1], [0], [0], [1], [0, 0, 1, 1], [], []>} : vector<32x256xbf16>, vector<256x16xbf16>, vector<32x16xf32> -> vector<32x16xf32>
    %104 = vector.extract_strided_slice %103 {offsets = [9, 0], sizes = [16, 16], strides = [1, 1]} : vector<32x16xf32> to vector<16x16xf32>
    %105 = arith.addf %100, %104 : vector<16x16xf32>
    %c5_78 = arith.constant 5 : index
    %c0_79 = arith.constant 0 : index
    %c0_80 = arith.constant 0 : index
    %106 = vector.load %arg2[%c5_78, %c0_79, %c0_80] : memref<7x256x16xbf16, #tpu.memory_space<vmem>>, vector<1x256x16xbf16>
    %107 = vector.shape_cast %106 : vector<1x256x16xbf16> to vector<256x16xbf16>
    %cst_81 = arith.constant dense<0.000000e+00> : vector<32x16xf32>
    %108 = tpu.matmul %81, %107, %cst_81 {dimension_numbers = #tpu.dot_dimension_numbers<[1], [0], [0], [1], [0, 0, 1, 1], [], []>} : vector<32x256xbf16>, vector<256x16xbf16>, vector<32x16xf32> -> vector<32x16xf32>
    %109 = vector.extract_strided_slice %108 {offsets = [10, 0], sizes = [16, 16], strides = [1, 1]} : vector<32x16xf32> to vector<16x16xf32>
    %110 = arith.addf %105, %109 : vector<16x16xf32>
    %c6 = arith.constant 6 : index
    %c0_82 = arith.constant 0 : index
    %c0_83 = arith.constant 0 : index
    %111 = vector.load %arg2[%c6, %c0_82, %c0_83] : memref<7x256x16xbf16, #tpu.memory_space<vmem>>, vector<1x256x16xbf16>
    %112 = vector.shape_cast %111 : vector<1x256x16xbf16> to vector<256x16xbf16>
    %cst_84 = arith.constant dense<0.000000e+00> : vector<32x16xf32>
    %113 = tpu.matmul %81, %112, %cst_84 {dimension_numbers = #tpu.dot_dimension_numbers<[1], [0], [0], [1], [0, 0, 1, 1], [], []>} : vector<32x256xbf16>, vector<256x16xbf16>, vector<32x16xf32> -> vector<32x16xf32>
    %114 = vector.extract_strided_slice %113 {offsets = [11, 0], sizes = [16, 16], strides = [1, 1]} : vector<32x16xf32> to vector<16x16xf32>
    %115 = arith.addf %110, %114 : vector<16x16xf32>
    %c0_85 = arith.constant 0 : index
    %116 = memref.load %arg3[%c0_85] : memref<1xf32, #tpu.memory_space<smem>>
    %117 = vector.broadcast %116 : f32 to vector<16x16xf32>
    %118 = arith.addf %115, %117 : vector<16x16xf32>
    %cst_86 = arith.constant 0.000000e+00 : f32
    %119 = vector.broadcast %cst_86 : f32 to vector<16x16xf32>
    %120 = arith.subf %119, %118 : vector<16x16xf32>
    %121 = math.exp %120 : vector<16x16xf32>
    %cst_87 = arith.constant 1.000000e+00 : f32
    %122 = vector.broadcast %cst_87 : f32 to vector<16x16xf32>
    %123 = arith.addf %122, %121 : vector<16x16xf32>
    %124 = tpu.reciprocal %123 {approx = true} : vector<16x16xf32> -> vector<16x16xf32>
    %125 = vector.extract_strided_slice %124 {offsets = [0, 0], sizes = [1, 16], strides = [1, 1]} : vector<16x16xf32> to vector<1x16xf32>
    %c0_88 = arith.constant 0 : index
    %c0_89 = arith.constant 0 : index
    %126 = vector.load %arg6[%c0_88, %c0_89] : memref<1x256xf32, #tpu.memory_space<vmem>>, vector<1x16xf32>
    tpu.vector_store %arg6[%c0_88, %c0_89], %125 {strides = array<i32>} : memref<1x256xf32, #tpu.memory_space<vmem>>, vector<1x16xf32>,
    %127 = vector.extract_strided_slice %124 {offsets = [1, 0], sizes = [1, 16], strides = [1, 1]} : vector<16x16xf32> to vector<1x16xf32>
    %c0_90 = arith.constant 0 : index
    %c16_91 = arith.constant 16 : index
    %128 = vector.load %arg6[%c0_90, %c16_91] : memref<1x256xf32, #tpu.memory_space<vmem>>, vector<1x16xf32>
    tpu.vector_store %arg6[%c0_90, %c16_91], %127 {strides = array<i32>} : memref<1x256xf32, #tpu.memory_space<vmem>>, vector<1x16xf32>,
    %129 = vector.extract_strided_slice %124 {offsets = [2, 0], sizes = [1, 16], strides = [1, 1]} : vector<16x16xf32> to vector<1x16xf32>
    %c0_92 = arith.constant 0 : index
    %c32 = arith.constant 32 : index
    %130 = vector.load %arg6[%c0_92, %c32] : memref<1x256xf32, #tpu.memory_space<vmem>>, vector<1x16xf32>
    tpu.vector_store %arg6[%c0_92, %c32], %129 {strides = array<i32>} : memref<1x256xf32, #tpu.memory_space<vmem>>, vector<1x16xf32>,
    %131 = vector.extract_strided_slice %124 {offsets = [3, 0], sizes = [1, 16], strides = [1, 1]} : vector<16x16xf32> to vector<1x16xf32>
    %c0_93 = arith.constant 0 : index
    %c48 = arith.constant 48 : index
    %132 = vector.load %arg6[%c0_93, %c48] : memref<1x256xf32, #tpu.memory_space<vmem>>, vector<1x16xf32>
    tpu.vector_store %arg6[%c0_93, %c48], %131 {strides = array<i32>} : memref<1x256xf32, #tpu.memory_space<vmem>>, vector<1x16xf32>,
    %133 = vector.extract_strided_slice %124 {offsets = [4, 0], sizes = [1, 16], strides = [1, 1]} : vector<16x16xf32> to vector<1x16xf32>
    %c0_94 = arith.constant 0 : index
    %c64 = arith.constant 64 : index
    %134 = vector.load %arg6[%c0_94, %c64] : memref<1x256xf32, #tpu.memory_space<vmem>>, vector<1x16xf32>
    tpu.vector_store %arg6[%c0_94, %c64], %133 {strides = array<i32>} : memref<1x256xf32, #tpu.memory_space<vmem>>, vector<1x16xf32>,
    %135 = vector.extract_strided_slice %124 {offsets = [5, 0], sizes = [1, 16], strides = [1, 1]} : vector<16x16xf32> to vector<1x16xf32>
    %c0_95 = arith.constant 0 : index
    %c80 = arith.constant 80 : index
    %136 = vector.load %arg6[%c0_95, %c80] : memref<1x256xf32, #tpu.memory_space<vmem>>, vector<1x16xf32>
    tpu.vector_store %arg6[%c0_95, %c80], %135 {strides = array<i32>} : memref<1x256xf32, #tpu.memory_space<vmem>>, vector<1x16xf32>,
    %137 = vector.extract_strided_slice %124 {offsets = [6, 0], sizes = [1, 16], strides = [1, 1]} : vector<16x16xf32> to vector<1x16xf32>
    %c0_96 = arith.constant 0 : index
    %c96 = arith.constant 96 : index
    %138 = vector.load %arg6[%c0_96, %c96] : memref<1x256xf32, #tpu.memory_space<vmem>>, vector<1x16xf32>
    tpu.vector_store %arg6[%c0_96, %c96], %137 {strides = array<i32>} : memref<1x256xf32, #tpu.memory_space<vmem>>, vector<1x16xf32>,
    %139 = vector.extract_strided_slice %124 {offsets = [7, 0], sizes = [1, 16], strides = [1, 1]} : vector<16x16xf32> to vector<1x16xf32>
    %c0_97 = arith.constant 0 : index
    %c112 = arith.constant 112 : index
    %140 = vector.load %arg6[%c0_97, %c112] : memref<1x256xf32, #tpu.memory_space<vmem>>, vector<1x16xf32>
    tpu.vector_store %arg6[%c0_97, %c112], %139 {strides = array<i32>} : memref<1x256xf32, #tpu.memory_space<vmem>>, vector<1x16xf32>,
    %141 = vector.extract_strided_slice %124 {offsets = [8, 0], sizes = [1, 16], strides = [1, 1]} : vector<16x16xf32> to vector<1x16xf32>
    %c0_98 = arith.constant 0 : index
    %c128_99 = arith.constant 128 : index
    %142 = vector.load %arg6[%c0_98, %c128_99] : memref<1x256xf32, #tpu.memory_space<vmem>>, vector<1x16xf32>
    tpu.vector_store %arg6[%c0_98, %c128_99], %141 {strides = array<i32>} : memref<1x256xf32, #tpu.memory_space<vmem>>, vector<1x16xf32>,
    %143 = vector.extract_strided_slice %124 {offsets = [9, 0], sizes = [1, 16], strides = [1, 1]} : vector<16x16xf32> to vector<1x16xf32>
    %c0_100 = arith.constant 0 : index
    %c144_101 = arith.constant 144 : index
    %144 = vector.load %arg6[%c0_100, %c144_101] : memref<1x256xf32, #tpu.memory_space<vmem>>, vector<1x16xf32>
    tpu.vector_store %arg6[%c0_100, %c144_101], %143 {strides = array<i32>} : memref<1x256xf32, #tpu.memory_space<vmem>>, vector<1x16xf32>,
    %145 = vector.extract_strided_slice %124 {offsets = [10, 0], sizes = [1, 16], strides = [1, 1]} : vector<16x16xf32> to vector<1x16xf32>
    %c0_102 = arith.constant 0 : index
    %c160 = arith.constant 160 : index
    %146 = vector.load %arg6[%c0_102, %c160] : memref<1x256xf32, #tpu.memory_space<vmem>>, vector<1x16xf32>
    tpu.vector_store %arg6[%c0_102, %c160], %145 {strides = array<i32>} : memref<1x256xf32, #tpu.memory_space<vmem>>, vector<1x16xf32>,
    %147 = vector.extract_strided_slice %124 {offsets = [11, 0], sizes = [1, 16], strides = [1, 1]} : vector<16x16xf32> to vector<1x16xf32>
    %c0_103 = arith.constant 0 : index
    %c176 = arith.constant 176 : index
    %148 = vector.load %arg6[%c0_103, %c176] : memref<1x256xf32, #tpu.memory_space<vmem>>, vector<1x16xf32>
    tpu.vector_store %arg6[%c0_103, %c176], %147 {strides = array<i32>} : memref<1x256xf32, #tpu.memory_space<vmem>>, vector<1x16xf32>,
    %149 = vector.extract_strided_slice %124 {offsets = [12, 0], sizes = [1, 16], strides = [1, 1]} : vector<16x16xf32> to vector<1x16xf32>
    %c0_104 = arith.constant 0 : index
    %c192 = arith.constant 192 : index
    %150 = vector.load %arg6[%c0_104, %c192] : memref<1x256xf32, #tpu.memory_space<vmem>>, vector<1x16xf32>
    tpu.vector_store %arg6[%c0_104, %c192], %149 {strides = array<i32>} : memref<1x256xf32, #tpu.memory_space<vmem>>, vector<1x16xf32>,
    %151 = vector.extract_strided_slice %124 {offsets = [13, 0], sizes = [1, 16], strides = [1, 1]} : vector<16x16xf32> to vector<1x16xf32>
    %c0_105 = arith.constant 0 : index
    %c208 = arith.constant 208 : index
    %152 = vector.load %arg6[%c0_105, %c208] : memref<1x256xf32, #tpu.memory_space<vmem>>, vector<1x16xf32>
    tpu.vector_store %arg6[%c0_105, %c208], %151 {strides = array<i32>} : memref<1x256xf32, #tpu.memory_space<vmem>>, vector<1x16xf32>,
    %153 = vector.extract_strided_slice %124 {offsets = [14, 0], sizes = [1, 16], strides = [1, 1]} : vector<16x16xf32> to vector<1x16xf32>
    %c0_106 = arith.constant 0 : index
    %c224 = arith.constant 224 : index
    %154 = vector.load %arg6[%c0_106, %c224] : memref<1x256xf32, #tpu.memory_space<vmem>>, vector<1x16xf32>
    tpu.vector_store %arg6[%c0_106, %c224], %153 {strides = array<i32>} : memref<1x256xf32, #tpu.memory_space<vmem>>, vector<1x16xf32>,
    %155 = vector.extract_strided_slice %124 {offsets = [15, 0], sizes = [1, 16], strides = [1, 1]} : vector<16x16xf32> to vector<1x16xf32>
    %c0_107 = arith.constant 0 : index
    %c240 = arith.constant 240 : index
    %156 = vector.load %arg6[%c0_107, %c240] : memref<1x256xf32, #tpu.memory_space<vmem>>, vector<1x16xf32>
    tpu.vector_store %arg6[%c0_107, %c240], %155 {strides = array<i32>} : memref<1x256xf32, #tpu.memory_space<vmem>>, vector<1x16xf32>,
    %c0_108 = arith.constant 0 : index
    %c0_109 = arith.constant 0 : index
    %c0_110 = arith.constant 0 : index
    %157 = vector.load %arg1[%c0_108, %c0_109, %c0_110] : memref<1x4x256xf32, #tpu.memory_space<vmem>>, vector<1x4x256xf32>
    %158 = vector.shape_cast %157 : vector<1x4x256xf32> to vector<4x256xf32>
    %c0_111 = arith.constant 0 : index
    %c0_112 = arith.constant 0 : index
    %159 = vector.load %arg6[%c0_111, %c0_112] : memref<1x256xf32, #tpu.memory_space<vmem>>, vector<1x256xf32>
    %160 = vector.broadcast %159 : vector<1x256xf32> to vector<4x256xf32>
    %161 = arith.mulf %158, %160 : vector<4x256xf32>
    %c0_113 = arith.constant 0 : index
    %c0_114 = arith.constant 0 : index
    %c0_115 = arith.constant 0 : index
    %162 = vector.load %arg4[%c0_113, %c0_114, %c0_115] : memref<1x4x256xf32, #tpu.memory_space<vmem>>, vector<1x4x256xf32>
    %163 = vector.shape_cast %162 : vector<1x4x256xf32> to vector<4x256xf32>
    %164 = vector.shape_cast %161 : vector<4x256xf32> to vector<1x4x256xf32>
    tpu.vector_store %arg4[%c0_113, %c0_114, %c0_115], %164 {strides = array<i32>} : memref<1x4x256xf32, #tpu.memory_space<vmem>>, vector<1x4x256xf32>,
    return
  }
  func.func @transform_0(%arg0: i32) -> (i32, i32, i32) {
    %c0_i32 = arith.constant 0 : i32
    %c0_i32_0 = arith.constant 0 : i32
    %c0_i32_1 = arith.constant 0 : i32
    return %arg0, %c0_i32, %c0_i32_0 : i32, i32, i32
  }
  func.func @transform_1(%arg0: i32) -> (i32, i32, i32) {
    %c0_i32 = arith.constant 0 : i32
    %c0_i32_0 = arith.constant 0 : i32
    %c0_i32_1 = arith.constant 0 : i32
    %c0_i32_2 = arith.constant 0 : i32
    return %c0_i32, %c0_i32_0, %c0_i32_1 : i32, i32, i32
  }
  func.func @transform_2(%arg0: i32) -> i32 {
    %c0_i32 = arith.constant 0 : i32
    %c0_i32_0 = arith.constant 0 : i32
    return %c0_i32 : i32
  }
  func.func @transform_3(%arg0: i32) -> (i32, i32, i32) {
    %c0_i32 = arith.constant 0 : i32
    %c0_i32_0 = arith.constant 0 : i32
    %c0_i32_1 = arith.constant 0 : i32
    return %arg0, %c0_i32, %c0_i32_0 : i32, i32, i32
  }
}

</mosaic_0001>

<llo_original>
// kernel: tpu_custom_call.1
$region0: #{tpu_custom_call.1}
  #allocation0 [shape = 'u32[]', space=smem, size = 0x4, offset = 0x4, fixed_abs, tag = 'smem constant byte address 0x4 - core index']
  #allocation1 [shape = 'u32[72,128]{1,0:T(1,128)}', space=vmem, size = 0x9000, scoped, tag = 'internal scratch']
  #allocation2 [shape = 'f32[32,256]{1,0:T(8,128)}', space=vmem, size = 0x8000, scoped, tag = 'scratch operand']
  #allocation3 [shape = 'f32[1,256]{1,0:T(1,128)}', space=vmem, size = 0x400, scoped, tag = 'scratch operand']
  #allocation4 [shape = 'f32[1]{0:T(128)S(6)}', space=smem, size = 0x200, scoped, tag = 'scoped memory for tpu_custom_call.1']
  %s0 = inlined_call_operand.vmem [shape: f32[2,4,256], index: 0, kind: input, shape index: {}]
  %s1 = inlined_call_operand.vmem [shape: bf16[7,256,16], index: 1, kind: input, shape index: {}]
  %s2 = inlined_call_operand.<no memory space> [shape: f32[1], index: 2, kind: input, shape index: {}]
  %s3 = inlined_call_operand.hbm [shape: f32[2,4,256], index: 3, kind: output, shape index: {}]
  %s4 = sld [smem:[#allocation0]]
  $region45: #{tpu_custom_call.1} parent=0
    _
  %s6 = ssub.s32 1, %s4
  %s7 = scalar_select 0, %s6, %s4
  %8 = sst [smem:[#allocation4]] %s2
  $region1: #{tpu_custom_call.1} parent=0
    #allocation5 [shape = 'u8[8192]{0}', space=vmem, size = 0x2000, scoped, tag = 'output window, operand 0']
    #allocation6 [shape = 's32[2]{0}', space=sflag, size = 0x8, scoped, tag = 'scoped memory for tpu_custom_call.1']
    %9 = vsyncpa [#allocation6], 0
    %s10 = scalar_lea.sflag [#allocation6], 1
    %11 = vsyncpa %s10, 0
    loop: start=0, step=1, limit=4
    $region2: #{tpu_custom_call.1} parent=1 // loop_pre_header
      _
    $region3: #{tpu_custom_call.1} parent=1 // loop_header
      %s13 = sphi 0, %s17
      %p14 = scmp.ge.s32.totalorder %s13, 4
      %s23 = sphi 0, %s25
      %s26 = sphi 0, %s23
      %s27 = sphi 0, %s26
      %s43 = sphi 0, %s27
      %s47 = sphi 0, %s47
      %s49 = sphi 0, %s47
      %s50 = sphi 0, %s49
      %s64 = sphi 0, %s50
      %s68 = sphi 0, %s68
      %s70 = sphi 0, %s68
      %s71 = sphi 0, %s70
      %s85 = sphi 0, %s71
      %s91 = sphi 0, %s93
      %s94 = sphi 0, %s91
      %s95 = sphi 0, %s94
      %s111 = sphi 0, %s95
    $region4: #{tpu_custom_call.1} parent=1 // loop_header_branch
      %16 = sbr.rel (%p14) target = $region8
    $region5: #{tpu_custom_call.1} parent=1 // loop_body
      %s18 = ssub.s32 %s13, 1
      %s19 = ssub.s32 %s13, 2
      %s20 = sadd.s32 %s13, 1
      %s21 = ssub.s32 %s13, %s20
      %p22 = scmp.eq.s32.totalorder %s21, 0
      %s24 = sadd.s32 %s23, 1
      %s25 = scalar_select %p22, %s23, %s24
      %p28 = pneg %p22
      %p29 = scmp.eq.s32.totalorder %s13, 1
      %p30 = por %p28, %p29
      %p31 = scmp.ne.s32.totalorder %s23, %s26
      %p32 = scmp.eq.s32.totalorder %s13, 0
      %p33 = por %p31, %p32
      %p34 = scmp.ne.s32.totalorder %s23, %s26
      %p35 = scmp.eq.s32.totalorder %s18, 1
      %p36 = por %p34, %p35
      %p37 = scmp.ne.s32.totalorder %s26, %s27
      %p38 = scmp.eq.s32.totalorder %s18, 0
      %p39 = por %p37, %p38
      %p40 = scmp.ne.s32.totalorder %s26, %s27
      %p41 = scmp.eq.s32.totalorder %s19, 1
      %p42 = por %p40, %p41
      %p44 = scmp.ne.s32.totalorder %s27, %s43
      %p45 = scmp.eq.s32.totalorder %s19, 0
      %p46 = por %p44, %p45
      %s48 = sadd.s32 %s47, 1
      %p51 = scmp.eq.s32.totalorder %s13, 1
      %p52 = scmp.ne.s32.totalorder %s47, %s49
      %p53 = scmp.eq.s32.totalorder %s13, 0
      %p54 = por %p52, %p53
      %p55 = scmp.ne.s32.totalorder %s47, %s49
      %p56 = scmp.eq.s32.totalorder %s18, 1
      %p57 = por %p55, %p56
      %p58 = scmp.ne.s32.totalorder %s49, %s50
      %p59 = scmp.eq.s32.totalorder %s18, 0
      %p60 = por %p58, %p59
      %p61 = scmp.ne.s32.totalorder %s49, %s50
      %p62 = scmp.eq.s32.totalorder %s19, 1
      %p63 = por %p61, %p62
      %p65 = scmp.ne.s32.totalorder %s50, %s64
      %p66 = scmp.eq.s32.totalorder %s19, 0
      %p67 = por %p65, %p66
      %s69 = sadd.s32 %s68, 1
      %p72 = scmp.eq.s32.totalorder %s13, 1
      %p73 = scmp.ne.s32.totalorder %s68, %s70
      %p74 = scmp.eq.s32.totalorder %s13, 0
      %p75 = por %p73, %p74
      %p76 = scmp.ne.s32.totalorder %s68, %s70
      %p77 = scmp.eq.s32.totalorder %s18, 1
      %p78 = por %p76, %p77
      %p79 = scmp.ne.s32.totalorder %s70, %s71
      %p80 = scmp.eq.s32.totalorder %s18, 0
      %p81 = por %p79, %p80
      %p82 = scmp.ne.s32.totalorder %s70, %s71
      %p83 = scmp.eq.s32.totalorder %s19, 1
      %p84 = por %p82, %p83
      %p86 = scmp.ne.s32.totalorder %s71, %s85
      %p87 = scmp.eq.s32.totalorder %s19, 0
      %p88 = por %p86, %p87
      %s89 = ssub.s32 %s13, %s20
      %p90 = scmp.eq.s32.totalorder %s89, 0
      %s92 = sadd.s32 %s91, 1
      %s93 = scalar_select %p90, %s91, %s92
      %p96 = pneg %p90
      %p97 = scmp.eq.s32.totalorder %s13, 1
      %p98 = por %p96, %p97
      %p99 = scmp.ne.s32.totalorder %s91, %s94
      %p100 = scmp.eq.s32.totalorder %s13, 0
      %p101 = por %p99, %p100
      %p102 = scmp.ne.s32.totalorder %s91, %s94
      %p103 = scmp.eq.s32.totalorder %s18, 1
      %p104 = por %p102, %p103
      %p105 = scmp.ne.s32.totalorder %s94, %s95
      %p106 = scmp.eq.s32.totalorder %s18, 0
      %p107 = por %p105, %p106
      %p108 = scmp.ne.s32.totalorder %s94, %s95
      %p109 = scmp.eq.s32.totalorder %s19, 1
      %p110 = por %p108, %p109
      %p112 = scmp.ne.s32.totalorder %s95, %s111
      %p113 = scmp.eq.s32.totalorder %s19, 0
      %p114 = por %p112, %p113
      %p115 = scmp.le.s32.totalorder 1, %s13
      %p116 = scmp.lt.s32.totalorder %s13, 3
      %p117 = pnand %p115, %p116
      %p118 = pneg %p117
      // Predicated region
      $region9: #{tpu_custom_call.1} parent=5 // pred_check
        _
      $region10: #{tpu_custom_call.1} parent=5 // pred_check_branch
        %120 = sbr.rel (%p117) target = $region12
      $region11: #{tpu_custom_call.1} parent=5 // pred_region
        %s121 = ssub.s32 %s13, 1
        // Predicated region
        $region13: #{tpu_custom_call.1} parent=11 // pred_check
          %p122 = pneg %p60
        $region14: #{tpu_custom_call.1} parent=11 // pred_check_branch
          %124 = sbr.rel (%p122) target = $region16
        $region15: #{tpu_custom_call.1} parent=11 // pred_region
          _
        $region16: #{tpu_custom_call.1} parent=11 // pred_fallthru
          _
        // Predicated region
        $region17: #{tpu_custom_call.1} parent=11 // pred_check
          %p125 = pneg %p81
        $region18: #{tpu_custom_call.1} parent=11 // pred_check_branch
          %127 = sbr.rel (%p125) target = $region20
        $region19: #{tpu_custom_call.1} parent=11 // pred_region
          _
        $region20: #{tpu_custom_call.1} parent=11 // pred_fallthru
          _
      $region12: #{tpu_custom_call.1} parent=5 // pred_fallthru
        _
      %p128 = scmp.lt.s32.totalorder %s13, 2
      // Predicated region
      $region21: #{tpu_custom_call.1} parent=5 // pred_check
        %p129 = pneg %p128
      $region22: #{tpu_custom_call.1} parent=5 // pred_check_branch
        %131 = sbr.rel (%p129) target = $region24
      $region23: #{tpu_custom_call.1} parent=5 // pred_region
        // Predicated region
        $region25: #{tpu_custom_call.1} parent=23 // pred_check
          %p132 = pneg %p33
        $region26: #{tpu_custom_call.1} parent=23 // pred_check_branch
          %134 = sbr.rel (%p132) target = $region28
        $region27: #{tpu_custom_call.1} parent=23 // pred_region
          %p135 = scmp.lt.s32.totalorder %s13, 1
          %s136 = scalar_select %p135, %s13, 1
          %s137 = smul.addr %s136, 2
          %s138 = smul.addr %s137, 4
          %s139 = scalar_lea.vmem %s0, %s138
        $region28: #{tpu_custom_call.1} parent=23 // pred_fallthru
          _
      $region24: #{tpu_custom_call.1} parent=5 // pred_fallthru
        _
      %p140 = scmp.le.s32.totalorder 1, %s13
      %p141 = scmp.lt.s32.totalorder %s13, 3
      %p142 = pnand %p140, %p141
      %p143 = pneg %p142
      // Predicated region
      $region29: #{tpu_custom_call.1} parent=5 // pred_check
        _
      $region30: #{tpu_custom_call.1} parent=5 // pred_check_branch
        %145 = sbr.rel (%p142) target = $region32
      $region31: #{tpu_custom_call.1} parent=5 // pred_region
        %s146 = ssub.s32 %s13, 1
        %p147 = scmp.lt.s32.totalorder %s18, 1
        %s148 = scalar_select %p147, %s18, 1
        %s149 = smul.addr %s148, 2
        %s150 = smul.addr %s149, 4
        %s151 = scalar_lea.vmem %s0, %s150
        %p152 = pneg %p39
        %p153 = pneg %p36
        %p154 = pneg %p60
        %p155 = pneg %p57
        %p156 = pneg %p81
        %p157 = pneg %p78
        %p158 = pneg %p107
        %p159 = pneg %p104
        %s160 = sand.u32 %s94, 1
        %s161 = scalar_lea.sflag [#allocation6], %s160
        %s162 = sand.u32 %s94, 1
        %s163 = smul.addr %s162, 8
        %s164 = scalar_lea.vmem [#allocation5], %s163
        %p165 = scmp.lt.s32.totalorder %s18, 1
        %s166 = scalar_select %p165, %s18, 1
        %s167 = smul.addr %s166, 2
        %s168 = smul.addr %s167, 4
        %s169 = scalar_lea.vmem %s0, %s168
        %v170 = vld [vmem:[%s169] sm:$0xff]
        %172 = vst [vmem:[#allocation1] ss:$2 sm:$0xff] %v170
        %v173 = vld.sshfl [vmem:[#allocation1] sm:$0xff pattern:$0x75316420]
        %v174 = vld.sshfl [vmem:[#allocation1 + $0x8] sm:$0xff pattern:$0x75316420]
        %vm177 = vcmask 1043456
        %v178 = vsel %vm177, %v173, -inf
        %v179 = vrot.slane %v178, 4
        %v180 = vmax.f32 %v178, %v179
        %v181 = vrot.slane %v180, 2
        %v182 = vmax.f32 %v180, %v181
        %v183 = vrot.slane %v182, 1
        %v184 = vmax.f32 %v182, %v183
        %v185 = vsel %vm177, %v174, -inf
        %v186 = vrot.slane %v185, 4
        %v187 = vmax.f32 %v185, %v186
        %v188 = vrot.slane %v187, 2
        %v189 = vmax.f32 %v187, %v188
        %v190 = vrot.slane %v189, 1
        %v191 = vmax.f32 %v189, %v190
        %192 = vst [vmem:[#allocation1] ss:$2 sm:$0xff] %v170
        %v193 = vld.sshfl [vmem:[#allocation1] sm:$0xff pattern:$0x75316420]
        %v194 = vld.sshfl [vmem:[#allocation1 + $0x8] sm:$0xff pattern:$0x75316420]
        %v197 = vsel %vm177, %v193, 0.0
        %v198 = vrot.slane %v197, 4
        %v199 = vadd.f32 %v197, %v198
        %v200 = vrot.slane %v199, 2
        %v201 = vadd.f32 %v199, %v200
        %v202 = vrot.slane %v201, 1
        %v203 = vadd.f32 %v201, %v202
        %v204 = vsel %vm177, %v194, 0.0
        %v205 = vrot.slane %v204, 4
        %v206 = vadd.f32 %v204, %v205
        %v207 = vrot.slane %v206, 2
        %v208 = vadd.f32 %v206, %v207
        %v209 = vrot.slane %v208, 1
        %v210 = vadd.f32 %v208, %v209
        %v211 = vmul.f32 %v203, 0.25
        %v212 = vmul.f32 %v210, 0.25
        %213 = vst [vmem:[#allocation2] sm:$0xe0] 0.0
        %214 = vst [vmem:[#allocation2 + $0x8] sm:$0xe0] 0.0
        %215 = vst [vmem:[#allocation2 + $0x30] sm:$0x7] 0.0
        %216 = vst [vmem:[#allocation2 + $0x38] sm:$0x7] 0.0
        %vm217 = vcmask 1047680
        %218 = vst.msk [vmem:[#allocation2 + $0x10] sm:$0xff] %vm217, 0.0
        %219 = vst.msk [vmem:[#allocation2 + $0x20] sm:$0xff] %vm217, 0.0
        %220 = vst.msk [vmem:[#allocation2 + $0x18] sm:$0xff] %vm217, 0.0
        %221 = vst.msk [vmem:[#allocation2 + $0x28] sm:$0xff] %vm217, 0.0
        %vm222 = vcmask 122880
        %223 = vst.msk [vmem:[#allocation2 + $0x10] sm:$0x1] %vm222, %v184
        %224 = vst.msk [vmem:[#allocation2 + $0x18] sm:$0x1] %vm222, %v211
        %226 = vrot.lane.b32.xlu0 %v184, 112
        %v227 = vpop.permute.xlu0 %226
        %229 = vst.msk [vmem:[#allocation2 + $0x11] sm:$0x1] %vm222, %v227
        %231 = vrot.lane.b32.xlu0 %v211, 112
        %v232 = vpop.permute.xlu0 %231
        %234 = vst.msk [vmem:[#allocation2 + $0x19] sm:$0x1] %vm222, %v232
        %235 = vrot.lane.b32.xlu0 %v184, 96
        %v236 = vpop.permute.xlu0 %235
        %238 = vst.msk [vmem:[#allocation2 + $0x12] sm:$0x1] %vm222, %v236
        %239 = vrot.lane.b32.xlu0 %v211, 96
        %v240 = vpop.permute.xlu0 %239
        %242 = vst.msk [vmem:[#allocation2 + $0x1a] sm:$0x1] %vm222, %v240
        %243 = vrot.lane.b32.xlu0 %v184, 80
        %v244 = vpop.permute.xlu0 %243
        %246 = vst.msk [vmem:[#allocation2 + $0x13] sm:$0x1] %vm222, %v244
        %247 = vrot.lane.b32.xlu0 %v211, 80
        %v248 = vpop.permute.xlu0 %247
        %250 = vst.msk [vmem:[#allocation2 + $0x1b] sm:$0x1] %vm222, %v248
        %251 = vrot.lane.b32.xlu0 %v184, 64
        %v252 = vpop.permute.xlu0 %251
        %254 = vst.msk [vmem:[#allocation2 + $0x14] sm:$0x1] %vm222, %v252
        %255 = vrot.lane.b32.xlu0 %v211, 64
        %v256 = vpop.permute.xlu0 %255
        %258 = vst.msk [vmem:[#allocation2 + $0x1c] sm:$0x1] %vm222, %v256
        %259 = vrot.lane.b32.xlu0 %v184, 48
        %v260 = vpop.permute.xlu0 %259
        %262 = vst.msk [vmem:[#allocation2 + $0x15] sm:$0x1] %vm222, %v260
        %263 = vrot.lane.b32.xlu0 %v211, 48
        %v264 = vpop.permute.xlu0 %263
        %266 = vst.msk [vmem:[#allocation2 + $0x1d] sm:$0x1] %vm222, %v264
        %267 = vrot.lane.b32.xlu0 %v184, 32
        %v268 = vpop.permute.xlu0 %267
        %270 = vst.msk [vmem:[#allocation2 + $0x16] sm:$0x1] %vm222, %v268
        %271 = vrot.lane.b32.xlu0 %v211, 32
        %v272 = vpop.permute.xlu0 %271
        %274 = vst.msk [vmem:[#allocation2 + $0x1e] sm:$0x1] %vm222, %v272
        %275 = vrot.lane.b32.xlu0 %v184, 16
        %v276 = vpop.permute.xlu0 %275
        %278 = vst.msk [vmem:[#allocation2 + $0x17] sm:$0x1] %vm222, %v276
        %279 = vrot.lane.b32.xlu0 %v211, 16
        %v280 = vpop.permute.xlu0 %279
        %282 = vst.msk [vmem:[#allocation2 + $0x1f] sm:$0x1] %vm222, %v280
        %283 = vst.msk [vmem:[#allocation2 + $0x20] sm:$0x1] %vm222, %v191
        %284 = vst.msk [vmem:[#allocation2 + $0x28] sm:$0x1] %vm222, %v212
        %286 = vrot.lane.b32.xlu0 %v191, 112
        %v287 = vpop.permute.xlu0 %286
        %289 = vst.msk [vmem:[#allocation2 + $0x21] sm:$0x1] %vm222, %v287
        %291 = vrot.lane.b32.xlu0 %v212, 112
        %v292 = vpop.permute.xlu0 %291
        %294 = vst.msk [vmem:[#allocation2 + $0x29] sm:$0x1] %vm222, %v292
        %295 = vrot.lane.b32.xlu0 %v191, 96
        %v296 = vpop.permute.xlu0 %295
        %298 = vst.msk [vmem:[#allocation2 + $0x22] sm:$0x1] %vm222, %v296
        %299 = vrot.lane.b32.xlu0 %v212, 96
        %v300 = vpop.permute.xlu0 %299
        %302 = vst.msk [vmem:[#allocation2 + $0x2a] sm:$0x1] %vm222, %v300
        %303 = vrot.lane.b32.xlu0 %v191, 80
        %v304 = vpop.permute.xlu0 %303
        %306 = vst.msk [vmem:[#allocation2 + $0x23] sm:$0x1] %vm222, %v304
        %307 = vrot.lane.b32.xlu0 %v212, 80
        %v308 = vpop.permute.xlu0 %307
        %310 = vst.msk [vmem:[#allocation2 + $0x2b] sm:$0x1] %vm222, %v308
        %311 = vrot.lane.b32.xlu0 %v191, 64
        %v312 = vpop.permute.xlu0 %311
        %314 = vst.msk [vmem:[#allocation2 + $0x24] sm:$0x1] %vm222, %v312
        %315 = vrot.lane.b32.xlu0 %v212, 64
        %v316 = vpop.permute.xlu0 %315
        %318 = vst.msk [vmem:[#allocation2 + $0x2c] sm:$0x1] %vm222, %v316
        %319 = vrot.lane.b32.xlu0 %v191, 48
        %v320 = vpop.permute.xlu0 %319
        %322 = vst.msk [vmem:[#allocation2 + $0x25] sm:$0x1] %vm222, %v320
        %323 = vrot.lane.b32.xlu0 %v212, 48
        %v324 = vpop.permute.xlu0 %323
        %326 = vst.msk [vmem:[#allocation2 + $0x2d] sm:$0x1] %vm222, %v324
        %327 = vrot.lane.b32.xlu0 %v191, 32
        %v328 = vpop.permute.xlu0 %327
        %330 = vst.msk [vmem:[#allocation2 + $0x26] sm:$0x1] %vm222, %v328
        %331 = vrot.lane.b32.xlu0 %v212, 32
        %v332 = vpop.permute.xlu0 %331
        %334 = vst.msk [vmem:[#allocation2 + $0x2e] sm:$0x1] %vm222, %v332
        %335 = vrot.lane.b32.xlu0 %v191, 16
        %v336 = vpop.permute.xlu0 %335
        %338 = vst.msk [vmem:[#allocation2 + $0x27] sm:$0x1] %vm222, %v336
        %339 = vrot.lane.b32.xlu0 %v212, 16
        %v340 = vpop.permute.xlu0 %339
        %342 = vst.msk [vmem:[#allocation2 + $0x2f] sm:$0x1] %vm222, %v340
        %v343 = vld [vmem:[#allocation2] sm:$0xff]
        %v344 = vld [vmem:[#allocation2 + $0x8] sm:$0xff]
        %v345 = vld [vmem:[#allocation2 + $0x10] sm:$0xff]
        %v346 = vld [vmem:[#allocation2 + $0x18] sm:$0xff]
        %v347 = vld [vmem:[#allocation2 + $0x20] sm:$0xff]
        %v348 = vld [vmem:[#allocation2 + $0x28] sm:$0xff]
        %v349 = vld [vmem:[#allocation2 + $0x30] sm:$0xff]
        %v350 = vld [vmem:[#allocation2 + $0x38] sm:$0xff]
        %v351 = vpack.c.bf16 %v345, %v343
        %v352 = vpack.c.bf16 %v346, %v344
        %v353 = vpack.c.bf16 %v349, %v347
        %v354 = vpack.c.bf16 %v350, %v348
        %v355 = vld [vmem:[%s1] sm:$0xf]
        %v356 = vld [vmem:[%s1 + $0x4] sm:$0xf]
        %v357 = vld [vmem:[%s1 + $0x8] sm:$0xf]
        %v358 = vld [vmem:[%s1 + $0xc] sm:$0xf]
        %v359 = vld [vmem:[%s1 + $0x10] sm:$0xf]
        %v360 = vld [vmem:[%s1 + $0x14] sm:$0xf]
        %v361 = vld [vmem:[%s1 + $0x18] sm:$0xf]
        %v362 = vld [vmem:[%s1 + $0x1c] sm:$0xf]
        %v363 = vld [vmem:[%s1 + $0x20] sm:$0xf]
        %v364 = vld [vmem:[%s1 + $0x24] sm:$0xf]
        %v365 = vld [vmem:[%s1 + $0x28] sm:$0xf]
        %v366 = vld [vmem:[%s1 + $0x2c] sm:$0xf]
        %v367 = vld [vmem:[%s1 + $0x30] sm:$0xf]
        %v368 = vld [vmem:[%s1 + $0x34] sm:$0xf]
        %v369 = vld [vmem:[%s1 + $0x38] sm:$0xf]
        %v370 = vld [vmem:[%s1 + $0x3c] sm:$0xf]
        %v371 = vld [vmem:[%s1 + $0x40] sm:$0xf]
        %v372 = vld [vmem:[%s1 + $0x44] sm:$0xf]
        %v373 = vld [vmem:[%s1 + $0x48] sm:$0xf]
        %v374 = vld [vmem:[%s1 + $0x4c] sm:$0xf]
        %v375 = vld [vmem:[%s1 + $0x50] sm:$0xf]
        %v376 = vld [vmem:[%s1 + $0x54] sm:$0xf]
        %v377 = vld [vmem:[%s1 + $0x58] sm:$0xf]
        %v378 = vld [vmem:[%s1 + $0x5c] sm:$0xf]
        %v379 = vld [vmem:[%s1 + $0x60] sm:$0xf]
        %v380 = vld [vmem:[%s1 + $0x64] sm:$0xf]
        %v381 = vld [vmem:[%s1 + $0x68] sm:$0xf]
        %v382 = vld [vmem:[%s1 + $0x6c] sm:$0xf]
        %v383 = vld [vmem:[%s1 + $0x70] sm:$0xf]
        %v384 = vld [vmem:[%s1 + $0x74] sm:$0xf]
        %v385 = vld [vmem:[%s1 + $0x78] sm:$0xf]
        %v386 = vld [vmem:[%s1 + $0x7c] sm:$0xf]
        %v419 = vunpack.c.l.b16 %v355
        %v420 = vunpack.c.l.b16 %v356
        %v421 = vunpack.c.l.b16 %v357
        %v422 = vunpack.c.l.b16 %v358
        %v423 = vunpack.c.l.b16 %v359
        %v424 = vunpack.c.l.b16 %v360
        %v425 = vunpack.c.l.b16 %v361
        %v426 = vunpack.c.l.b16 %v362
        %v427 = vunpack.c.l.b16 %v363
        %v428 = vunpack.c.l.b16 %v364
        %v429 = vunpack.c.l.b16 %v365
        %v430 = vunpack.c.l.b16 %v366
        %v431 = vunpack.c.l.b16 %v367
        %v432 = vunpack.c.l.b16 %v368
        %v433 = vunpack.c.l.b16 %v369
        %v434 = vunpack.c.l.b16 %v370
        %v435 = vunpack.c.l.b16 %v371
        %v436 = vunpack.c.l.b16 %v372
        %v437 = vunpack.c.l.b16 %v373
        %v438 = vunpack.c.l.b16 %v374
        %v439 = vunpack.c.l.b16 %v375
        %v440 = vunpack.c.l.b16 %v376
        %v441 = vunpack.c.l.b16 %v377
        %v442 = vunpack.c.l.b16 %v378
        %v443 = vunpack.c.l.b16 %v379
        %v444 = vunpack.c.l.b16 %v380
        %v445 = vunpack.c.l.b16 %v381
        %v446 = vunpack.c.l.b16 %v382
        %v447 = vunpack.c.l.b16 %v383
        %v448 = vunpack.c.l.b16 %v384
        %v449 = vunpack.c.l.b16 %v385
        %v450 = vunpack.c.l.b16 %v386
        %v451 = vpack.c.b16 %v420, %v419
        %v452 = vpack.c.b16 %v422, %v421
        %v453 = vpack.c.b16 %v424, %v423
        %v454 = vpack.c.b16 %v426, %v425
        %v455 = vpack.c.b16 %v428, %v427
        %v456 = vpack.c.b16 %v430, %v429
        %v457 = vpack.c.b16 %v432, %v431
        %v458 = vpack.c.b16 %v434, %v433
        %v459 = vpack.c.b16 %v436, %v435
        %v460 = vpack.c.b16 %v438, %v437
        %v461 = vpack.c.b16 %v440, %v439
        %v462 = vpack.c.b16 %v442, %v441
        %v463 = vpack.c.b16 %v444, %v443
        %v464 = vpack.c.b16 %v446, %v445
        %v465 = vpack.c.b16 %v448, %v447
        %v466 = vpack.c.b16 %v450, %v449
        %483 = vmatpush.bf16.msra.mxu0 %v458
        %484 = vmatpush.bf16.msra.mxu0 %v457
        %485 = vmatpush.bf16.msra.mxu0 %v456
        %486 = vmatpush.bf16.msra.mxu0 %v455
        %487 = vmatpush.bf16.msra.mxu0 %v454
        %488 = vmatpush.bf16.msra.mxu0 %v453
        %489 = vmatpush.bf16.msra.mxu0 %v452
        %490 = vmatpush.bf16.msra.mxu0 %v451
        %491 = vmatmul.bf16.gmra.mxu0 %v351
        %v492 = vpop.f32.mrf.mxu0
        %v493 = vadd.f32 0.0, %v492
        %v494 = vpop.f32.mrf.mxu0
        %v495 = vadd.f32 0.0, %v494
        %496 = vmatmul.bf16.gmra.mxu0 %v353
        %v497 = vpop.f32.mrf.mxu0
        %v498 = vadd.f32 0.0, %v497
        %v499 = vpop.f32.mrf.mxu0
        %500 = vdwg.mxu0
        %501 = vmatpush.bf16.msra.mxu0 %v466
        %502 = vmatpush.bf16.msra.mxu0 %v465
        %503 = vmatpush.bf16.msra.mxu0 %v464
        %504 = vmatpush.bf16.msra.mxu0 %v463
        %505 = vmatpush.bf16.msra.mxu0 %v462
        %506 = vmatpush.bf16.msra.mxu0 %v461
        %507 = vmatpush.bf16.msra.mxu0 %v460
        %508 = vmatpush.bf16.msra.mxu0 %v459
        %509 = vmatmul.bf16.gmra.mxu0 %v352
        %v510 = vpop.f32.mrf.mxu0
        %v511 = vadd.f32 %v493, %v510
        %v512 = vpop.f32.mrf.mxu0
        %v513 = vadd.f32 %v495, %v512
        %514 = vmatmul.bf16.gmra.mxu0 %v354
        %v515 = vpop.f32.mrf.mxu0
        %v516 = vadd.f32 %v498, %v515
        %v517 = vpop.f32.mrf.mxu0
        %518 = vdwg.mxu0
        %s519 = scalar_lea.vmem %s1, 128
        %v520 = vld [vmem:[%s519] sm:$0xf]
        %v521 = vld [vmem:[%s519 + $0x4] sm:$0xf]
        %v522 = vld [vmem:[%s519 + $0x8] sm:$0xf]
        %v523 = vld [vmem:[%s519 + $0xc] sm:$0xf]
        %v524 = vld [vmem:[%s519 + $0x10] sm:$0xf]
        %v525 = vld [vmem:[%s519 + $0x14] sm:$0xf]
        %v526 = vld [vmem:[%s519 + $0x18] sm:$0xf]
        %v527 = vld [vmem:[%s519 + $0x1c] sm:$0xf]
        %v528 = vld [vmem:[%s519 + $0x20] sm:$0xf]
        %v529 = vld [vmem:[%s519 + $0x24] sm:$0xf]
        %v530 = vld [vmem:[%s519 + $0x28] sm:$0xf]
        %v531 = vld [vmem:[%s519 + $0x2c] sm:$0xf]
        %v532 = vld [vmem:[%s519 + $0x30] sm:$0xf]
        %v533 = vld [vmem:[%s519 + $0x34] sm:$0xf]
        %v534 = vld [vmem:[%s519 + $0x38] sm:$0xf]
        %v535 = vld [vmem:[%s519 + $0x3c] sm:$0xf]
        %v536 = vld [vmem:[%s519 + $0x40] sm:$0xf]
        %v537 = vld [vmem:[%s519 + $0x44] sm:$0xf]
        %v538 = vld [vmem:[%s519 + $0x48] sm:$0xf]
        %v539 = vld [vmem:[%s519 + $0x4c] sm:$0xf]
        %v540 = vld [vmem:[%s519 + $0x50] sm:$0xf]
        %v541 = vld [vmem:[%s519 + $0x54] sm:$0xf]
        %v542 = vld [vmem:[%s519 + $0x58] sm:$0xf]
        %v543 = vld [vmem:[%s519 + $0x5c] sm:$0xf]
        %v544 = vld [vmem:[%s519 + $0x60] sm:$0xf]
        %v545 = vld [vmem:[%s519 + $0x64] sm:$0xf]
        %v546 = vld [vmem:[%s519 + $0x68] sm:$0xf]
        %v547 = vld [vmem:[%s519 + $0x6c] sm:$0xf]
        %v548 = vld [vmem:[%s519 + $0x70] sm:$0xf]
        %v549 = vld [vmem:[%s519 + $0x74] sm:$0xf]
        %v550 = vld [vmem:[%s519 + $0x78] sm:$0xf]
        %v551 = vld [vmem:[%s519 + $0x7c] sm:$0xf]
        %v584 = vunpack.c.l.b16 %v520
        %v585 = vunpack.c.l.b16 %v521
        %v586 = vunpack.c.l.b16 %v522
        %v587 = vunpack.c.l.b16 %v523
        %v588 = vunpack.c.l.b16 %v524
        %v589 = vunpack.c.l.b16 %v525
        %v590 = vunpack.c.l.b16 %v526
        %v591 = vunpack.c.l.b16 %v527
        %v592 = vunpack.c.l.b16 %v528
        %v593 = vunpack.c.l.b16 %v529
        %v594 = vunpack.c.l.b16 %v530
        %v595 = vunpack.c.l.b16 %v531
        %v596 = vunpack.c.l.b16 %v532
        %v597 = vunpack.c.l.b16 %v533
        %v598 = vunpack.c.l.b16 %v534
        %v599 = vunpack.c.l.b16 %v535
        %v600 = vunpack.c.l.b16 %v536
        %v601 = vunpack.c.l.b16 %v537
        %v602 = vunpack.c.l.b16 %v538
        %v603 = vunpack.c.l.b16 %v539
        %v604 = vunpack.c.l.b16 %v540
        %v605 = vunpack.c.l.b16 %v541
        %v606 = vunpack.c.l.b16 %v542
        %v607 = vunpack.c.l.b16 %v543
        %v608 = vunpack.c.l.b16 %v544
        %v609 = vunpack.c.l.b16 %v545
        %v610 = vunpack.c.l.b16 %v546
        %v611 = vunpack.c.l.b16 %v547
        %v612 = vunpack.c.l.b16 %v548
        %v613 = vunpack.c.l.b16 %v549
        %v614 = vunpack.c.l.b16 %v550
        %v615 = vunpack.c.l.b16 %v551
        %v616 = vpack.c.b16 %v585, %v584
        %v617 = vpack.c.b16 %v587, %v586
        %v618 = vpack.c.b16 %v589, %v588
        %v619 = vpack.c.b16 %v591, %v590
        %v620 = vpack.c.b16 %v593, %v592
        %v621 = vpack.c.b16 %v595, %v594
        %v622 = vpack.c.b16 %v597, %v596
        %v623 = vpack.c.b16 %v599, %v598
        %v624 = vpack.c.b16 %v601, %v600
        %v625 = vpack.c.b16 %v603, %v602
        %v626 = vpack.c.b16 %v605, %v604
        %v627 = vpack.c.b16 %v607, %v606
        %v628 = vpack.c.b16 %v609, %v608
        %v629 = vpack.c.b16 %v611, %v610
        %v630 = vpack.c.b16 %v613, %v612
        %v631 = vpack.c.b16 %v615, %v614
        %648 = vmatpush.bf16.msra.mxu0 %v623
        %649 = vmatpush.bf16.msra.mxu0 %v622
        %650 = vmatpush.bf16.msra.mxu0 %v621
        %651 = vmatpush.bf16.msra.mxu0 %v620
        %652 = vmatpush.bf16.msra.mxu0 %v619
        %653 = vmatpush.bf16.msra.mxu0 %v618
        %654 = vmatpush.bf16.msra.mxu0 %v617
        %655 = vmatpush.bf16.msra.mxu0 %v616
        %656 = vmatmul.bf16.gmra.mxu0 %v351
        %v657 = vpop.f32.mrf.mxu0
        %v658 = vadd.f32 0.0, %v657
        %v659 = vpop.f32.mrf.mxu0
        %v660 = vadd.f32 0.0, %v659
        %661 = vmatmul.bf16.gmra.mxu0 %v353
        %v662 = vpop.f32.mrf.mxu0
        %v663 = vadd.f32 0.0, %v662
        %v664 = vpop.f32.mrf.mxu0
        %665 = vdwg.mxu0
        %666 = vmatpush.bf16.msra.mxu0 %v631
        %667 = vmatpush.bf16.msra.mxu0 %v630
        %668 = vmatpush.bf16.msra.mxu0 %v629
        %669 = vmatpush.bf16.msra.mxu0 %v628
        %670 = vmatpush.bf16.msra.mxu0 %v627
        %671 = vmatpush.bf16.msra.mxu0 %v626
        %672 = vmatpush.bf16.msra.mxu0 %v625
        %673 = vmatpush.bf16.msra.mxu0 %v624
        %674 = vmatmul.bf16.gmra.mxu0 %v352
        %v675 = vpop.f32.mrf.mxu0
        %v676 = vadd.f32 %v658, %v675
        %v677 = vpop.f32.mrf.mxu0
        %v678 = vadd.f32 %v660, %v677
        %679 = vmatmul.bf16.gmra.mxu0 %v354
        %v680 = vpop.f32.mrf.mxu0
        %v681 = vadd.f32 %v663, %v680
        %v682 = vpop.f32.mrf.mxu0
        %683 = vdwg.mxu0
        %vm687 = vcmask 1046528
        %v688 = vrot.slane %v676, 1
        %v689 = vrot.slane %v678, 1
        %v690 = vsel %vm687, %v688, %v689
        %v691 = vrot.slane %v681, 1
        %v692 = vsel %vm687, %v689, %v691
        %v696 = vadd.f32 %v511, %v690
        %v697 = vadd.f32 %v513, %v692
        %v698 = vadd.f32 %v516, %v691
        %s699 = scalar_lea.vmem %s1, 256
        %v700 = vld [vmem:[%s699] sm:$0xf]
        %v701 = vld [vmem:[%s699 + $0x4] sm:$0xf]
        %v702 = vld [vmem:[%s699 + $0x8] sm:$0xf]
        %v703 = vld [vmem:[%s699 + $0xc] sm:$0xf]
        %v704 = vld [vmem:[%s699 + $0x10] sm:$0xf]
        %v705 = vld [vmem:[%s699 + $0x14] sm:$0xf]
        %v706 = vld [vmem:[%s699 + $0x18] sm:$0xf]
        %v707 = vld [vmem:[%s699 + $0x1c] sm:$0xf]
        %v708 = vld [vmem:[%s699 + $0x20] sm:$0xf]
        %v709 = vld [vmem:[%s699 + $0x24] sm:$0xf]
        %v710 = vld [vmem:[%s699 + $0x28] sm:$0xf]
        %v711 = vld [vmem:[%s699 + $0x2c] sm:$0xf]
        %v712 = vld [vmem:[%s699 + $0x30] sm:$0xf]
        %v713 = vld [vmem:[%s699 + $0x34] sm:$0xf]
        %v714 = vld [vmem:[%s699 + $0x38] sm:$0xf]
        %v715 = vld [vmem:[%s699 + $0x3c] sm:$0xf]
        %v716 = vld [vmem:[%s699 + $0x40] sm:$0xf]
        %v717 = vld [vmem:[%s699 + $0x44] sm:$0xf]
        %v718 = vld [vmem:[%s699 + $0x48] sm:$0xf]
        %v719 = vld [vmem:[%s699 + $0x4c] sm:$0xf]
        %v720 = vld [vmem:[%s699 + $0x50] sm:$0xf]
        %v721 = vld [vmem:[%s699 + $0x54] sm:$0xf]
        %v722 = vld [vmem:[%s699 + $0x58] sm:$0xf]
        %v723 = vld [vmem:[%s699 + $0x5c] sm:$0xf]
        %v724 = vld [vmem:[%s699 + $0x60] sm:$0xf]
        %v725 = vld [vmem:[%s699 + $0x64] sm:$0xf]
        %v726 = vld [vmem:[%s699 + $0x68] sm:$0xf]
        %v727 = vld [vmem:[%s699 + $0x6c] sm:$0xf]
        %v728 = vld [vmem:[%s699 + $0x70] sm:$0xf]
        %v729 = vld [vmem:[%s699 + $0x74] sm:$0xf]
        %v730 = vld [vmem:[%s699 + $0x78] sm:$0xf]
        %v731 = vld [vmem:[%s699 + $0x7c] sm:$0xf]
        %v764 = vunpack.c.l.b16 %v700
        %v765 = vunpack.c.l.b16 %v701
        %v766 = vunpack.c.l.b16 %v702
        %v767 = vunpack.c.l.b16 %v703
        %v768 = vunpack.c.l.b16 %v704
        %v769 = vunpack.c.l.b16 %v705
        %v770 = vunpack.c.l.b16 %v706
        %v771 = vunpack.c.l.b16 %v707
        %v772 = vunpack.c.l.b16 %v708
        %v773 = vunpack.c.l.b16 %v709
        %v774 = vunpack.c.l.b16 %v710
        %v775 = vunpack.c.l.b16 %v711
        %v776 = vunpack.c.l.b16 %v712
        %v777 = vunpack.c.l.b16 %v713
        %v778 = vunpack.c.l.b16 %v714
        %v779 = vunpack.c.l.b16 %v715
        %v780 = vunpack.c.l.b16 %v716
        %v781 = vunpack.c.l.b16 %v717
        %v782 = vunpack.c.l.b16 %v718
        %v783 = vunpack.c.l.b16 %v719
        %v784 = vunpack.c.l.b16 %v720
        %v785 = vunpack.c.l.b16 %v721
        %v786 = vunpack.c.l.b16 %v722
        %v787 = vunpack.c.l.b16 %v723
        %v788 = vunpack.c.l.b16 %v724
        %v789 = vunpack.c.l.b16 %v725
        %v790 = vunpack.c.l.b16 %v726
        %v791 = vunpack.c.l.b16 %v727
        %v792 = vunpack.c.l.b16 %v728
        %v793 = vunpack.c.l.b16 %v729
        %v794 = vunpack.c.l.b16 %v730
        %v795 = vunpack.c.l.b16 %v731
        %v796 = vpack.c.b16 %v765, %v764
        %v797 = vpack.c.b16 %v767, %v766
        %v798 = vpack.c.b16 %v769, %v768
        %v799 = vpack.c.b16 %v771, %v770
        %v800 = vpack.c.b16 %v773, %v772
        %v801 = vpack.c.b16 %v775, %v774
        %v802 = vpack.c.b16 %v777, %v776
        %v803 = vpack.c.b16 %v779, %v778
        %v804 = vpack.c.b16 %v781, %v780
        %v805 = vpack.c.b16 %v783, %v782
        %v806 = vpack.c.b16 %v785, %v784
        %v807 = vpack.c.b16 %v787, %v786
        %v808 = vpack.c.b16 %v789, %v788
        %v809 = vpack.c.b16 %v791, %v790
        %v810 = vpack.c.b16 %v793, %v792
        %v811 = vpack.c.b16 %v795, %v794
        %828 = vmatpush.bf16.msra.mxu0 %v803
        %829 = vmatpush.bf16.msra.mxu0 %v802
        %830 = vmatpush.bf16.msra.mxu0 %v801
        %831 = vmatpush.bf16.msra.mxu0 %v800
        %832 = vmatpush.bf16.msra.mxu0 %v799
        %833 = vmatpush.bf16.msra.mxu0 %v798
        %834 = vmatpush.bf16.msra.mxu0 %v797
        %835 = vmatpush.bf16.msra.mxu0 %v796
        %836 = vmatmul.bf16.gmra.mxu0 %v351
        %v837 = vpop.f32.mrf.mxu0
        %v838 = vadd.f32 0.0, %v837
        %v839 = vpop.f32.mrf.mxu0
        %v840 = vadd.f32 0.0, %v839
        %841 = vmatmul.bf16.gmra.mxu0 %v353
        %v842 = vpop.f32.mrf.mxu0
        %v843 = vadd.f32 0.0, %v842
        %v844 = vpop.f32.mrf.mxu0
        %845 = vdwg.mxu0
        %846 = vmatpush.bf16.msra.mxu0 %v811
        %847 = vmatpush.bf16.msra.mxu0 %v810
        %848 = vmatpush.bf16.msra.mxu0 %v809
        %849 = vmatpush.bf16.msra.mxu0 %v808
        %850 = vmatpush.bf16.msra.mxu0 %v807
        %851 = vmatpush.bf16.msra.mxu0 %v806
        %852 = vmatpush.bf16.msra.mxu0 %v805
        %853 = vmatpush.bf16.msra.mxu0 %v804
        %854 = vmatmul.bf16.gmra.mxu0 %v352
        %v855 = vpop.f32.mrf.mxu0
        %v856 = vadd.f32 %v838, %v855
        %v857 = vpop.f32.mrf.mxu0
        %v858 = vadd.f32 %v840, %v857
        %859 = vmatmul.bf16.gmra.mxu0 %v354
        %v860 = vpop.f32.mrf.mxu0
        %v861 = vadd.f32 %v843, %v860
        %v862 = vpop.f32.mrf.mxu0
        %863 = vdwg.mxu0
        %vm867 = vcmask 1045504
        %v868 = vrot.slane %v856, 2
        %v869 = vrot.slane %v858, 2
        %v870 = vsel %vm867, %v868, %v869
        %v871 = vrot.slane %v861, 2
        %v872 = vsel %vm867, %v869, %v871
        %v876 = vadd.f32 %v696, %v870
        %v877 = vadd.f32 %v697, %v872
        %v878 = vadd.f32 %v698, %v871
        %s879 = scalar_lea.vmem %s1, 384
        %v880 = vld [vmem:[%s879] sm:$0xf]
        %v881 = vld [vmem:[%s879 + $0x4] sm:$0xf]
        %v882 = vld [vmem:[%s879 + $0x8] sm:$0xf]
        %v883 = vld [vmem:[%s879 + $0xc] sm:$0xf]
        %v884 = vld [vmem:[%s879 + $0x10] sm:$0xf]
        %v885 = vld [vmem:[%s879 + $0x14] sm:$0xf]
        %v886 = vld [vmem:[%s879 + $0x18] sm:$0xf]
        %v887 = vld [vmem:[%s879 + $0x1c] sm:$0xf]
        %v888 = vld [vmem:[%s879 + $0x20] sm:$0xf]
        %v889 = vld [vmem:[%s879 + $0x24] sm:$0xf]
        %v890 = vld [vmem:[%s879 + $0x28] sm:$0xf]
        %v891 = vld [vmem:[%s879 + $0x2c] sm:$0xf]
        %v892 = vld [vmem:[%s879 + $0x30] sm:$0xf]
        %v893 = vld [vmem:[%s879 + $0x34] sm:$0xf]
        %v894 = vld [vmem:[%s879 + $0x38] sm:$0xf]
        %v895 = vld [vmem:[%s879 + $0x3c] sm:$0xf]
        %v896 = vld [vmem:[%s879 + $0x40] sm:$0xf]
        %v897 = vld [vmem:[%s879 + $0x44] sm:$0xf]
        %v898 = vld [vmem:[%s879 + $0x48] sm:$0xf]
        %v899 = vld [vmem:[%s879 + $0x4c] sm:$0xf]
        %v900 = vld [vmem:[%s879 + $0x50] sm:$0xf]
        %v901 = vld [vmem:[%s879 + $0x54] sm:$0xf]
        %v902 = vld [vmem:[%s879 + $0x58] sm:$0xf]
        %v903 = vld [vmem:[%s879 + $0x5c] sm:$0xf]
        %v904 = vld [vmem:[%s879 + $0x60] sm:$0xf]
        %v905 = vld [vmem:[%s879 + $0x64] sm:$0xf]
        %v906 = vld [vmem:[%s879 + $0x68] sm:$0xf]
        %v907 = vld [vmem:[%s879 + $0x6c] sm:$0xf]
        %v908 = vld [vmem:[%s879 + $0x70] sm:$0xf]
        %v909 = vld [vmem:[%s879 + $0x74] sm:$0xf]
        %v910 = vld [vmem:[%s879 + $0x78] sm:$0xf]
        %v911 = vld [vmem:[%s879 + $0x7c] sm:$0xf]
        %v944 = vunpack.c.l.b16 %v880
        %v945 = vunpack.c.l.b16 %v881
        %v946 = vunpack.c.l.b16 %v882
        %v947 = vunpack.c.l.b16 %v883
        %v948 = vunpack.c.l.b16 %v884
        %v949 = vunpack.c.l.b16 %v885
        %v950 = vunpack.c.l.b16 %v886
        %v951 = vunpack.c.l.b16 %v887
        %v952 = vunpack.c.l.b16 %v888
        %v953 = vunpack.c.l.b16 %v889
        %v954 = vunpack.c.l.b16 %v890
        %v955 = vunpack.c.l.b16 %v891
        %v956 = vunpack.c.l.b16 %v892
        %v957 = vunpack.c.l.b16 %v893
        %v958 = vunpack.c.l.b16 %v894
        %v959 = vunpack.c.l.b16 %v895
        %v960 = vunpack.c.l.b16 %v896
        %v961 = vunpack.c.l.b16 %v897
        %v962 = vunpack.c.l.b16 %v898
        %v963 = vunpack.c.l.b16 %v899
        %v964 = vunpack.c.l.b16 %v900
        %v965 = vunpack.c.l.b16 %v901
        %v966 = vunpack.c.l.b16 %v902
        %v967 = vunpack.c.l.b16 %v903
        %v968 = vunpack.c.l.b16 %v904
        %v969 = vunpack.c.l.b16 %v905
        %v970 = vunpack.c.l.b16 %v906
        %v971 = vunpack.c.l.b16 %v907
        %v972 = vunpack.c.l.b16 %v908
        %v973 = vunpack.c.l.b16 %v909
        %v974 = vunpack.c.l.b16 %v910
        %v975 = vunpack.c.l.b16 %v911
        %v976 = vpack.c.b16 %v945, %v944
        %v977 = vpack.c.b16 %v947, %v946
        %v978 = vpack.c.b16 %v949, %v948
        %v979 = vpack.c.b16 %v951, %v950
        %v980 = vpack.c.b16 %v953, %v952
        %v981 = vpack.c.b16 %v955, %v954
        %v982 = vpack.c.b16 %v957, %v956
        %v983 = vpack.c.b16 %v959, %v958
        %v984 = vpack.c.b16 %v961, %v960
        %v985 = vpack.c.b16 %v963, %v962
        %v986 = vpack.c.b16 %v965, %v964
        %v987 = vpack.c.b16 %v967, %v966
        %v988 = vpack.c.b16 %v969, %v968
        %v989 = vpack.c.b16 %v971, %v970
        %v990 = vpack.c.b16 %v973, %v972
        %v991 = vpack.c.b16 %v975, %v974
        %1008 = vmatpush.bf16.msra.mxu0 %v983
        %1009 = vmatpush.bf16.msra.mxu0 %v982
        %1010 = vmatpush.bf16.msra.mxu0 %v981
        %1011 = vmatpush.bf16.msra.mxu0 %v980
        %1012 = vmatpush.bf16.msra.mxu0 %v979
        %1013 = vmatpush.bf16.msra.mxu0 %v978
        %1014 = vmatpush.bf16.msra.mxu0 %v977
        %1015 = vmatpush.bf16.msra.mxu0 %v976
        %1016 = vmatmul.bf16.gmra.mxu0 %v351
        %v1017 = vpop.f32.mrf.mxu0
        %v1018 = vpop.f32.mrf.mxu0
        %v1019 = vadd.f32 0.0, %v1018
        %1020 = vmatmul.bf16.gmra.mxu0 %v353
        %v1021 = vpop.f32.mrf.mxu0
        %v1022 = vadd.f32 0.0, %v1021
        %v1023 = vpop.f32.mrf.mxu0
        %1024 = vdwg.mxu0
        %1025 = vmatpush.bf16.msra.mxu0 %v991
        %1026 = vmatpush.bf16.msra.mxu0 %v990
        %1027 = vmatpush.bf16.msra.mxu0 %v989
        %1028 = vmatpush.bf16.msra.mxu0 %v988
        %1029 = vmatpush.bf16.msra.mxu0 %v987
        %1030 = vmatpush.bf16.msra.mxu0 %v986
        %1031 = vmatpush.bf16.msra.mxu0 %v985
        %1032 = vmatpush.bf16.msra.mxu0 %v984
        %1033 = vmatmul.bf16.gmra.mxu0 %v352
        %v1034 = vpop.f32.mrf.mxu0
        %v1035 = vpop.f32.mrf.mxu0
        %v1036 = vadd.f32 %v1019, %v1035
        %1037 = vmatmul.bf16.gmra.mxu0 %v354
        %v1038 = vpop.f32.mrf.mxu0
        %v1039 = vadd.f32 %v1022, %v1038
        %v1040 = vpop.f32.mrf.mxu0
        %1041 = vdwg.mxu0
        %vm1044 = vcmask 1044480
        %v1045 = vrot.slane %v1036, 3
        %v1046 = vrot.slane %v1039, 3
        %v1047 = vsel %vm1044, %v1045, %v1046
        %v1051 = vadd.f32 %v876, %v1045
        %v1052 = vadd.f32 %v877, %v1047
        %v1053 = vadd.f32 %v878, %v1046
        %s1054 = scalar_lea.vmem %s1, 512
        %v1055 = vld [vmem:[%s1054] sm:$0xf]
        %v1056 = vld [vmem:[%s1054 + $0x4] sm:$0xf]
        %v1057 = vld [vmem:[%s1054 + $0x8] sm:$0xf]
        %v1058 = vld [vmem:[%s1054 + $0xc] sm:$0xf]
        %v1059 = vld [vmem:[%s1054 + $0x10] sm:$0xf]
        %v1060 = vld [vmem:[%s1054 + $0x14] sm:$0xf]
        %v1061 = vld [vmem:[%s1054 + $0x18] sm:$0xf]
        %v1062 = vld [vmem:[%s1054 + $0x1c] sm:$0xf]
        %v1063 = vld [vmem:[%s1054 + $0x20] sm:$0xf]
        %v1064 = vld [vmem:[%s1054 + $0x24] sm:$0xf]
        %v1065 = vld [vmem:[%s1054 + $0x28] sm:$0xf]
        %v1066 = vld [vmem:[%s1054 + $0x2c] sm:$0xf]
        %v1067 = vld [vmem:[%s1054 + $0x30] sm:$0xf]
        %v1068 = vld [vmem:[%s1054 + $0x34] sm:$0xf]
        %v1069 = vld [vmem:[%s1054 + $0x38] sm:$0xf]
        %v1070 = vld [vmem:[%s1054 + $0x3c] sm:$0xf]
        %v1071 = vld [vmem:[%s1054 + $0x40] sm:$0xf]
        %v1072 = vld [vmem:[%s1054 + $0x44] sm:$0xf]
        %v1073 = vld [vmem:[%s1054 + $0x48] sm:$0xf]
        %v1074 = vld [vmem:[%s1054 + $0x4c] sm:$0xf]
        %v1075 = vld [vmem:[%s1054 + $0x50] sm:$0xf]
        %v1076 = vld [vmem:[%s1054 + $0x54] sm:$0xf]
        %v1077 = vld [vmem:[%s1054 + $0x58] sm:$0xf]
        %v1078 = vld [vmem:[%s1054 + $0x5c] sm:$0xf]
        %v1079 = vld [vmem:[%s1054 + $0x60] sm:$0xf]
        %v1080 = vld [vmem:[%s1054 + $0x64] sm:$0xf]
        %v1081 = vld [vmem:[%s1054 + $0x68] sm:$0xf]
        %v1082 = vld [vmem:[%s1054 + $0x6c] sm:$0xf]
        %v1083 = vld [vmem:[%s1054 + $0x70] sm:$0xf]
        %v1084 = vld [vmem:[%s1054 + $0x74] sm:$0xf]
        %v1085 = vld [vmem:[%s1054 + $0x78] sm:$0xf]
        %v1086 = vld [vmem:[%s1054 + $0x7c] sm:$0xf]
        %v1119 = vunpack.c.l.b16 %v1055
        %v1120 = vunpack.c.l.b16 %v1056
        %v1121 = vunpack.c.l.b16 %v1057
        %v1122 = vunpack.c.l.b16 %v1058
        %v1123 = vunpack.c.l.b16 %v1059
        %v1124 = vunpack.c.l.b16 %v1060
        %v1125 = vunpack.c.l.b16 %v1061
        %v1126 = vunpack.c.l.b16 %v1062
        %v1127 = vunpack.c.l.b16 %v1063
        %v1128 = vunpack.c.l.b16 %v1064
        %v1129 = vunpack.c.l.b16 %v1065
        %v1130 = vunpack.c.l.b16 %v1066
        %v1131 = vunpack.c.l.b16 %v1067
        %v1132 = vunpack.c.l.b16 %v1068
        %v1133 = vunpack.c.l.b16 %v1069
        %v1134 = vunpack.c.l.b16 %v1070
        %v1135 = vunpack.c.l.b16 %v1071
        %v1136 = vunpack.c.l.b16 %v1072
        %v1137 = vunpack.c.l.b16 %v1073
        %v1138 = vunpack.c.l.b16 %v1074
        %v1139 = vunpack.c.l.b16 %v1075
        %v1140 = vunpack.c.l.b16 %v1076
        %v1141 = vunpack.c.l.b16 %v1077
        %v1142 = vunpack.c.l.b16 %v1078
        %v1143 = vunpack.c.l.b16 %v1079
        %v1144 = vunpack.c.l.b16 %v1080
        %v1145 = vunpack.c.l.b16 %v1081
        %v1146 = vunpack.c.l.b16 %v1082
        %v1147 = vunpack.c.l.b16 %v1083
        %v1148 = vunpack.c.l.b16 %v1084
        %v1149 = vunpack.c.l.b16 %v1085
        %v1150 = vunpack.c.l.b16 %v1086
        %v1151 = vpack.c.b16 %v1120, %v1119
        %v1152 = vpack.c.b16 %v1122, %v1121
        %v1153 = vpack.c.b16 %v1124, %v1123
        %v1154 = vpack.c.b16 %v1126, %v1125
        %v1155 = vpack.c.b16 %v1128, %v1127
        %v1156 = vpack.c.b16 %v1130, %v1129
        %v1157 = vpack.c.b16 %v1132, %v1131
        %v1158 = vpack.c.b16 %v1134, %v1133
        %v1159 = vpack.c.b16 %v1136, %v1135
        %v1160 = vpack.c.b16 %v1138, %v1137
        %v1161 = vpack.c.b16 %v1140, %v1139
        %v1162 = vpack.c.b16 %v1142, %v1141
        %v1163 = vpack.c.b16 %v1144, %v1143
        %v1164 = vpack.c.b16 %v1146, %v1145
        %v1165 = vpack.c.b16 %v1148, %v1147
        %v1166 = vpack.c.b16 %v1150, %v1149
        %1183 = vmatpush.bf16.msra.mxu0 %v1158
        %1184 = vmatpush.bf16.msra.mxu0 %v1157
        %1185 = vmatpush.bf16.msra.mxu0 %v1156
        %1186 = vmatpush.bf16.msra.mxu0 %v1155
        %1187 = vmatpush.bf16.msra.mxu0 %v1154
        %1188 = vmatpush.bf16.msra.mxu0 %v1153
        %1189 = vmatpush.bf16.msra.mxu0 %v1152
        %1190 = vmatpush.bf16.msra.mxu0 %v1151
        %1191 = vmatmul.bf16.gmra.mxu0 %v351
        %v1192 = vpop.f32.mrf.mxu0
        %v1193 = vpop.f32.mrf.mxu0
        %v1194 = vadd.f32 0.0, %v1193
        %1195 = vmatmul.bf16.gmra.mxu0 %v353
        %v1196 = vpop.f32.mrf.mxu0
        %v1197 = vadd.f32 0.0, %v1196
        %v1198 = vpop.f32.mrf.mxu0
        %v1199 = vadd.f32 0.0, %v1198
        %1200 = vdwg.mxu0
        %1201 = vmatpush.bf16.msra.mxu0 %v1166
        %1202 = vmatpush.bf16.msra.mxu0 %v1165
        %1203 = vmatpush.bf16.msra.mxu0 %v1164
        %1204 = vmatpush.bf16.msra.mxu0 %v1163
        %1205 = vmatpush.bf16.msra.mxu0 %v1162
        %1206 = vmatpush.bf16.msra.mxu0 %v1161
        %1207 = vmatpush.bf16.msra.mxu0 %v1160
        %1208 = vmatpush.bf16.msra.mxu0 %v1159
        %1209 = vmatmul.bf16.gmra.mxu0 %v352
        %v1210 = vpop.f32.mrf.mxu0
        %v1211 = vpop.f32.mrf.mxu0
        %v1212 = vadd.f32 %v1194, %v1211
        %1213 = vmatmul.bf16.gmra.mxu0 %v354
        %v1214 = vpop.f32.mrf.mxu0
        %v1215 = vadd.f32 %v1197, %v1214
        %v1216 = vpop.f32.mrf.mxu0
        %v1217 = vadd.f32 %v1199, %v1216
        %1218 = vdwg.mxu0
        %v1222 = vrot.slane %v1212, 4
        %v1223 = vrot.slane %v1215, 4
        %v1224 = vsel %vm177, %v1222, %v1223
        %v1225 = vrot.slane %v1217, 4
        %v1226 = vsel %vm177, %v1223, %v1225
        %v1230 = vadd.f32 %v1051, %v1222
        %v1231 = vadd.f32 %v1052, %v1224
        %v1232 = vadd.f32 %v1053, %v1226
        %s1233 = scalar_lea.vmem %s1, 640
        %v1234 = vld [vmem:[%s1233] sm:$0xf]
        %v1235 = vld [vmem:[%s1233 + $0x4] sm:$0xf]
        %v1236 = vld [vmem:[%s1233 + $0x8] sm:$0xf]
        %v1237 = vld [vmem:[%s1233 + $0xc] sm:$0xf]
        %v1238 = vld [vmem:[%s1233 + $0x10] sm:$0xf]
        %v1239 = vld [vmem:[%s1233 + $0x14] sm:$0xf]
        %v1240 = vld [vmem:[%s1233 + $0x18] sm:$0xf]
        %v1241 = vld [vmem:[%s1233 + $0x1c] sm:$0xf]
        %v1242 = vld [vmem:[%s1233 + $0x20] sm:$0xf]
        %v1243 = vld [vmem:[%s1233 + $0x24] sm:$0xf]
        %v1244 = vld [vmem:[%s1233 + $0x28] sm:$0xf]
        %v1245 = vld [vmem:[%s1233 + $0x2c] sm:$0xf]
        %v1246 = vld [vmem:[%s1233 + $0x30] sm:$0xf]
        %v1247 = vld [vmem:[%s1233 + $0x34] sm:$0xf]
        %v1248 = vld [vmem:[%s1233 + $0x38] sm:$0xf]
        %v1249 = vld [vmem:[%s1233 + $0x3c] sm:$0xf]
        %v1250 = vld [vmem:[%s1233 + $0x40] sm:$0xf]
        %v1251 = vld [vmem:[%s1233 + $0x44] sm:$0xf]
        %v1252 = vld [vmem:[%s1233 + $0x48] sm:$0xf]
        %v1253 = vld [vmem:[%s1233 + $0x4c] sm:$0xf]
        %v1254 = vld [vmem:[%s1233 + $0x50] sm:$0xf]
        %v1255 = vld [vmem:[%s1233 + $0x54] sm:$0xf]
        %v1256 = vld [vmem:[%s1233 + $0x58] sm:$0xf]
        %v1257 = vld [vmem:[%s1233 + $0x5c] sm:$0xf]
        %v1258 = vld [vmem:[%s1233 + $0x60] sm:$0xf]
        %v1259 = vld [vmem:[%s1233 + $0x64] sm:$0xf]
        %v1260 = vld [vmem:[%s1233 + $0x68] sm:$0xf]
        %v1261 = vld [vmem:[%s1233 + $0x6c] sm:$0xf]
        %v1262 = vld [vmem:[%s1233 + $0x70] sm:$0xf]
        %v1263 = vld [vmem:[%s1233 + $0x74] sm:$0xf]
        %v1264 = vld [vmem:[%s1233 + $0x78] sm:$0xf]
        %v1265 = vld [vmem:[%s1233 + $0x7c] sm:$0xf]
        %v1298 = vunpack.c.l.b16 %v1234
        %v1299 = vunpack.c.l.b16 %v1235
        %v1300 = vunpack.c.l.b16 %v1236
        %v1301 = vunpack.c.l.b16 %v1237
        %v1302 = vunpack.c.l.b16 %v1238
        %v1303 = vunpack.c.l.b16 %v1239
        %v1304 = vunpack.c.l.b16 %v1240
        %v1305 = vunpack.c.l.b16 %v1241
        %v1306 = vunpack.c.l.b16 %v1242
        %v1307 = vunpack.c.l.b16 %v1243
        %v1308 = vunpack.c.l.b16 %v1244
        %v1309 = vunpack.c.l.b16 %v1245
        %v1310 = vunpack.c.l.b16 %v1246
        %v1311 = vunpack.c.l.b16 %v1247
        %v1312 = vunpack.c.l.b16 %v1248
        %v1313 = vunpack.c.l.b16 %v1249
        %v1314 = vunpack.c.l.b16 %v1250
        %v1315 = vunpack.c.l.b16 %v1251
        %v1316 = vunpack.c.l.b16 %v1252
        %v1317 = vunpack.c.l.b16 %v1253
        %v1318 = vunpack.c.l.b16 %v1254
        %v1319 = vunpack.c.l.b16 %v1255
        %v1320 = vunpack.c.l.b16 %v1256
        %v1321 = vunpack.c.l.b16 %v1257
        %v1322 = vunpack.c.l.b16 %v1258
        %v1323 = vunpack.c.l.b16 %v1259
        %v1324 = vunpack.c.l.b16 %v1260
        %v1325 = vunpack.c.l.b16 %v1261
        %v1326 = vunpack.c.l.b16 %v1262
        %v1327 = vunpack.c.l.b16 %v1263
        %v1328 = vunpack.c.l.b16 %v1264
        %v1329 = vunpack.c.l.b16 %v1265
        %v1330 = vpack.c.b16 %v1299, %v1298
        %v1331 = vpack.c.b16 %v1301, %v1300
        %v1332 = vpack.c.b16 %v1303, %v1302
        %v1333 = vpack.c.b16 %v1305, %v1304
        %v1334 = vpack.c.b16 %v1307, %v1306
        %v1335 = vpack.c.b16 %v1309, %v1308
        %v1336 = vpack.c.b16 %v1311, %v1310
        %v1337 = vpack.c.b16 %v1313, %v1312
        %v1338 = vpack.c.b16 %v1315, %v1314
        %v1339 = vpack.c.b16 %v1317, %v1316
        %v1340 = vpack.c.b16 %v1319, %v1318
        %v1341 = vpack.c.b16 %v1321, %v1320
        %v1342 = vpack.c.b16 %v1323, %v1322
        %v1343 = vpack.c.b16 %v1325, %v1324
        %v1344 = vpack.c.b16 %v1327, %v1326
        %v1345 = vpack.c.b16 %v1329, %v1328
        %1362 = vmatpush.bf16.msra.mxu0 %v1337
        %1363 = vmatpush.bf16.msra.mxu0 %v1336
        %1364 = vmatpush.bf16.msra.mxu0 %v1335
        %1365 = vmatpush.bf16.msra.mxu0 %v1334
        %1366 = vmatpush.bf16.msra.mxu0 %v1333
        %1367 = vmatpush.bf16.msra.mxu0 %v1332
        %1368 = vmatpush.bf16.msra.mxu0 %v1331
        %1369 = vmatpush.bf16.msra.mxu0 %v1330
        %1370 = vmatmul.bf16.gmra.mxu0 %v351
        %v1371 = vpop.f32.mrf.mxu0
        %v1372 = vpop.f32.mrf.mxu0
        %v1373 = vadd.f32 0.0, %v1372
        %1374 = vmatmul.bf16.gmra.mxu0 %v353
        %v1375 = vpop.f32.mrf.mxu0
        %v1376 = vadd.f32 0.0, %v1375
        %v1377 = vpop.f32.mrf.mxu0
        %v1378 = vadd.f32 0.0, %v1377
        %1379 = vdwg.mxu0
        %1380 = vmatpush.bf16.msra.mxu0 %v1345
        %1381 = vmatpush.bf16.msra.mxu0 %v1344
        %1382 = vmatpush.bf16.msra.mxu0 %v1343
        %1383 = vmatpush.bf16.msra.mxu0 %v1342
        %1384 = vmatpush.bf16.msra.mxu0 %v1341
        %1385 = vmatpush.bf16.msra.mxu0 %v1340
        %1386 = vmatpush.bf16.msra.mxu0 %v1339
        %1387 = vmatpush.bf16.msra.mxu0 %v1338
        %1388 = vmatmul.bf16.gmra.mxu0 %v352
        %v1389 = vpop.f32.mrf.mxu0
        %v1390 = vpop.f32.mrf.mxu0
        %v1391 = vadd.f32 %v1373, %v1390
        %1392 = vmatmul.bf16.gmra.mxu0 %v354
        %v1393 = vpop.f32.mrf.mxu0
        %v1394 = vadd.f32 %v1376, %v1393
        %v1395 = vpop.f32.mrf.mxu0
        %v1396 = vadd.f32 %v1378, %v1395
        %1397 = vdwg.mxu0
        %vm1401 = vcmask 1042432
        %v1402 = vrot.slane %v1391, 5
        %v1403 = vrot.slane %v1394, 5
        %v1404 = vsel %vm1401, %v1402, %v1403
        %v1405 = vrot.slane %v1396, 5
        %v1406 = vsel %vm1401, %v1403, %v1405
        %v1410 = vadd.f32 %v1230, %v1402
        %v1411 = vadd.f32 %v1231, %v1404
        %v1412 = vadd.f32 %v1232, %v1406
        %s1413 = scalar_lea.vmem %s1, 768
        %v1414 = vld [vmem:[%s1413] sm:$0xf]
        %v1415 = vld [vmem:[%s1413 + $0x4] sm:$0xf]
        %v1416 = vld [vmem:[%s1413 + $0x8] sm:$0xf]
        %v1417 = vld [vmem:[%s1413 + $0xc] sm:$0xf]
        %v1418 = vld [vmem:[%s1413 + $0x10] sm:$0xf]
        %v1419 = vld [vmem:[%s1413 + $0x14] sm:$0xf]
        %v1420 = vld [vmem:[%s1413 + $0x18] sm:$0xf]
        %v1421 = vld [vmem:[%s1413 + $0x1c] sm:$0xf]
        %v1422 = vld [vmem:[%s1413 + $0x20] sm:$0xf]
        %v1423 = vld [vmem:[%s1413 + $0x24] sm:$0xf]
        %v1424 = vld [vmem:[%s1413 + $0x28] sm:$0xf]
        %v1425 = vld [vmem:[%s1413 + $0x2c] sm:$0xf]
        %v1426 = vld [vmem:[%s1413 + $0x30] sm:$0xf]
        %v1427 = vld [vmem:[%s1413 + $0x34] sm:$0xf]
        %v1428 = vld [vmem:[%s1413 + $0x38] sm:$0xf]
        %v1429 = vld [vmem:[%s1413 + $0x3c] sm:$0xf]
        %v1430 = vld [vmem:[%s1413 + $0x40] sm:$0xf]
        %v1431 = vld [vmem:[%s1413 + $0x44] sm:$0xf]
        %v1432 = vld [vmem:[%s1413 + $0x48] sm:$0xf]
        %v1433 = vld [vmem:[%s1413 + $0x4c] sm:$0xf]
        %v1434 = vld [vmem:[%s1413 + $0x50] sm:$0xf]
        %v1435 = vld [vmem:[%s1413 + $0x54] sm:$0xf]
        %v1436 = vld [vmem:[%s1413 + $0x58] sm:$0xf]
        %v1437 = vld [vmem:[%s1413 + $0x5c] sm:$0xf]
        %v1438 = vld [vmem:[%s1413 + $0x60] sm:$0xf]
        %v1439 = vld [vmem:[%s1413 + $0x64] sm:$0xf]
        %v1440 = vld [vmem:[%s1413 + $0x68] sm:$0xf]
        %v1441 = vld [vmem:[%s1413 + $0x6c] sm:$0xf]
        %v1442 = vld [vmem:[%s1413 + $0x70] sm:$0xf]
        %v1443 = vld [vmem:[%s1413 + $0x74] sm:$0xf]
        %v1444 = vld [vmem:[%s1413 + $0x78] sm:$0xf]
        %v1445 = vld [vmem:[%s1413 + $0x7c] sm:$0xf]
        %v1478 = vunpack.c.l.b16 %v1414
        %v1479 = vunpack.c.l.b16 %v1415
        %v1480 = vunpack.c.l.b16 %v1416
        %v1481 = vunpack.c.l.b16 %v1417
        %v1482 = vunpack.c.l.b16 %v1418
        %v1483 = vunpack.c.l.b16 %v1419
        %v1484 = vunpack.c.l.b16 %v1420
        %v1485 = vunpack.c.l.b16 %v1421
        %v1486 = vunpack.c.l.b16 %v1422
        %v1487 = vunpack.c.l.b16 %v1423
        %v1488 = vunpack.c.l.b16 %v1424
        %v1489 = vunpack.c.l.b16 %v1425
        %v1490 = vunpack.c.l.b16 %v1426
        %v1491 = vunpack.c.l.b16 %v1427
        %v1492 = vunpack.c.l.b16 %v1428
        %v1493 = vunpack.c.l.b16 %v1429
        %v1494 = vunpack.c.l.b16 %v1430
        %v1495 = vunpack.c.l.b16 %v1431
        %v1496 = vunpack.c.l.b16 %v1432
        %v1497 = vunpack.c.l.b16 %v1433
        %v1498 = vunpack.c.l.b16 %v1434
        %v1499 = vunpack.c.l.b16 %v1435
        %v1500 = vunpack.c.l.b16 %v1436
        %v1501 = vunpack.c.l.b16 %v1437
        %v1502 = vunpack.c.l.b16 %v1438
        %v1503 = vunpack.c.l.b16 %v1439
        %v1504 = vunpack.c.l.b16 %v1440
        %v1505 = vunpack.c.l.b16 %v1441
        %v1506 = vunpack.c.l.b16 %v1442
        %v1507 = vunpack.c.l.b16 %v1443
        %v1508 = vunpack.c.l.b16 %v1444
        %v1509 = vunpack.c.l.b16 %v1445
        %v1510 = vpack.c.b16 %v1479, %v1478
        %v1511 = vpack.c.b16 %v1481, %v1480
        %v1512 = vpack.c.b16 %v1483, %v1482
        %v1513 = vpack.c.b16 %v1485, %v1484
        %v1514 = vpack.c.b16 %v1487, %v1486
        %v1515 = vpack.c.b16 %v1489, %v1488
        %v1516 = vpack.c.b16 %v1491, %v1490
        %v1517 = vpack.c.b16 %v1493, %v1492
        %v1518 = vpack.c.b16 %v1495, %v1494
        %v1519 = vpack.c.b16 %v1497, %v1496
        %v1520 = vpack.c.b16 %v1499, %v1498
        %v1521 = vpack.c.b16 %v1501, %v1500
        %v1522 = vpack.c.b16 %v1503, %v1502
        %v1523 = vpack.c.b16 %v1505, %v1504
        %v1524 = vpack.c.b16 %v1507, %v1506
        %v1525 = vpack.c.b16 %v1509, %v1508
        %1542 = vmatpush.bf16.msra.mxu0 %v1517
        %1543 = vmatpush.bf16.msra.mxu0 %v1516
        %1544 = vmatpush.bf16.msra.mxu0 %v1515
        %1545 = vmatpush.bf16.msra.mxu0 %v1514
        %1546 = vmatpush.bf16.msra.mxu0 %v1513
        %1547 = vmatpush.bf16.msra.mxu0 %v1512
        %1548 = vmatpush.bf16.msra.mxu0 %v1511
        %1549 = vmatpush.bf16.msra.mxu0 %v1510
        %1550 = vmatmul.bf16.gmra.mxu0 %v351
        %v1551 = vpop.f32.mrf.mxu0
        %v1552 = vpop.f32.mrf.mxu0
        %v1553 = vadd.f32 0.0, %v1552
        %1554 = vmatmul.bf16.gmra.mxu0 %v353
        %v1555 = vpop.f32.mrf.mxu0
        %v1556 = vadd.f32 0.0, %v1555
        %v1557 = vpop.f32.mrf.mxu0
        %v1558 = vadd.f32 0.0, %v1557
        %1559 = vdwg.mxu0
        %1560 = vmatpush.bf16.msra.mxu0 %v1525
        %1561 = vmatpush.bf16.msra.mxu0 %v1524
        %1562 = vmatpush.bf16.msra.mxu0 %v1523
        %1563 = vmatpush.bf16.msra.mxu0 %v1522
        %1564 = vmatpush.bf16.msra.mxu0 %v1521
        %1565 = vmatpush.bf16.msra.mxu0 %v1520
        %1566 = vmatpush.bf16.msra.mxu0 %v1519
        %1567 = vmatpush.bf16.msra.mxu0 %v1518
        %1568 = vmatmul.bf16.gmra.mxu0 %v352
        %v1569 = vpop.f32.mrf.mxu0
        %v1570 = vpop.f32.mrf.mxu0
        %v1571 = vadd.f32 %v1553, %v1570
        %1572 = vmatmul.bf16.gmra.mxu0 %v354
        %v1573 = vpop.f32.mrf.mxu0
        %v1574 = vadd.f32 %v1556, %v1573
        %v1575 = vpop.f32.mrf.mxu0
        %v1576 = vadd.f32 %v1558, %v1575
        %1577 = vdwg.mxu0
        %vm1581 = vcmask 1041408
        %v1582 = vrot.slane %v1571, 6
        %v1583 = vrot.slane %v1574, 6
        %v1584 = vsel %vm1581, %v1582, %v1583
        %v1585 = vrot.slane %v1576, 6
        %v1586 = vsel %vm1581, %v1583, %v1585
        %v1590 = vadd.f32 %v1410, %v1582
        %v1591 = vadd.f32 %v1411, %v1584
        %v1592 = vadd.f32 %v1412, %v1586
        %s1593 = sld [smem:[#allocation4]]
        %v1594 = vstv %s1593
        %v1595 = vadd.f32 %v1590, %v1594
        %v1596 = vadd.f32 %v1591, %v1594
        %v1597 = vadd.f32 %v1592, %v1594
        %v1598 = vsub.f32 0.0, %v1595
        %v1599 = vsub.f32 0.0, %v1596
        %v1600 = vsub.f32 0.0, %v1597
        %v1601 = vmul.f32 %v1598, 1.442695
        %v1602 = vpow.pop %v1601
        %v1603 = vmul.f32 %v1599, 1.442695
        %v1604 = vpow.pop %v1603
        %v1605 = vmul.f32 %v1600, 1.442695
        %v1606 = vpow.pop %v1605
        %v1607 = vadd.f32 %v1602, 1.0
        %v1608 = vadd.f32 %v1604, 1.0
        %v1609 = vadd.f32 %v1606, 1.0
        %v1610 = vrcp.pop %v1607
        %v1611 = vrcp.pop %v1608
        %v1612 = vrcp.pop %v1609
        %1614 = vst [vmem:[#allocation1] sm:$0xff] %v1610
        %s1615 = scalar_lea.vmem [#allocation1], 5
        %v1616 = vld [vmem:[%s1615] ss:$9 sm:$0xff]
        %v1618 = vlaneseq
        %vm1619 = vcmp.ge.s32.totalorder %v1618, 0
        %vm1620 = vcmp.lt.s32.totalorder %v1618, 16
        %vm1621 = vmand %vm1619, %vm1620
        %1622 = vst.msk [vmem:[#allocation3] sm:$0x1] %vm1621, %v1616
        %1623 = vst [vmem:[#allocation1] sm:$0xff] %v1610
        %s1624 = scalar_lea.vmem [#allocation1], 6
        %v1625 = vld [vmem:[%s1624] ss:$9 sm:$0xff]
        %1626 = vrot.lane.b32.xlu0 %v1625, 16
        %v1627 = vpop.permute.xlu0 %1626
        %vm1629 = vcmp.ge.s32.totalorder %v1618, 16
        %vm1630 = vcmp.lt.s32.totalorder %v1618, 32
        %vm1631 = vmand %vm1629, %vm1630
        %1632 = vst.msk [vmem:[#allocation3] sm:$0x1] %vm1631, %v1627
        %1633 = vst [vmem:[#allocation1] sm:$0xff] %v1610
        %s1634 = scalar_lea.vmem [#allocation1], 7
        %v1635 = vld [vmem:[%s1634] ss:$9 sm:$0xff]
        %1636 = vrot.lane.b32.xlu0 %v1635, 32
        %v1637 = vpop.permute.xlu0 %1636
        %vm1639 = vcmp.ge.s32.totalorder %v1618, 32
        %vm1640 = vcmp.lt.s32.totalorder %v1618, 48
        %vm1641 = vmand %vm1639, %vm1640
        %1642 = vst.msk [vmem:[#allocation3] sm:$0x1] %vm1641, %v1637
        %1644 = vrot.lane.b32.xlu0 %v1611, 48
        %v1645 = vpop.permute.xlu0 %1644
        %vm1647 = vcmp.ge.s32.totalorder %v1618, 48
        %vm1648 = vcmp.lt.s32.totalorder %v1618, 64
        %vm1649 = vmand %vm1647, %vm1648
        %1650 = vst.msk [vmem:[#allocation3] sm:$0x1] %vm1649, %v1645
        %1651 = vst [vmem:[#allocation1] sm:$0xff] %v1611
        %s1652 = scalar_lea.vmem [#allocation1], 1
        %v1653 = vld [vmem:[%s1652] ss:$9 sm:$0xff]
        %1654 = vrot.lane.b32.xlu0 %v1653, 64
        %v1655 = vpop.permute.xlu0 %1654
        %vm1657 = vcmp.ge.s32.totalorder %v1618, 64
        %vm1658 = vcmp.lt.s32.totalorder %v1618, 80
        %vm1659 = vmand %vm1657, %vm1658
        %1660 = vst.msk [vmem:[#allocation3] sm:$0x1] %vm1659, %v1655
        %1661 = vst [vmem:[#allocation1] sm:$0xff] %v1611
        %s1662 = scalar_lea.vmem [#allocation1], 2
        %v1663 = vld [vmem:[%s1662] ss:$9 sm:$0xff]
        %1664 = vrot.lane.b32.xlu0 %v1663, 80
        %v1665 = vpop.permute.xlu0 %1664
        %vm1667 = vcmp.ge.s32.totalorder %v1618, 80
        %vm1668 = vcmp.lt.s32.totalorder %v1618, 96
        %vm1669 = vmand %vm1667, %vm1668
        %1670 = vst.msk [vmem:[#allocation3] sm:$0x1] %vm1669, %v1665
        %1671 = vst [vmem:[#allocation1] sm:$0xff] %v1611
        %s1672 = scalar_lea.vmem [#allocation1], 3
        %v1673 = vld [vmem:[%s1672] ss:$9 sm:$0xff]
        %1674 = vrot.lane.b32.xlu0 %v1673, 96
        %v1675 = vpop.permute.xlu0 %1674
        %vm1677 = vcmp.ge.s32.totalorder %v1618, 96
        %vm1678 = vcmp.lt.s32.totalorder %v1618, 112
        %vm1679 = vmand %vm1677, %vm1678
        %1680 = vst.msk [vmem:[#allocation3] sm:$0x1] %vm1679, %v1675
        %1681 = vst [vmem:[#allocation1] sm:$0xff] %v1611
        %s1682 = scalar_lea.vmem [#allocation1], 4
        %v1683 = vld [vmem:[%s1682] ss:$9 sm:$0xff]
        %1684 = vrot.lane.b32.xlu0 %v1683, 112
        %v1685 = vpop.permute.xlu0 %1684
        %vm1687 = vcmp.ge.s32.totalorder %v1618, 112
        %vm1688 = vcmp.lt.s32.totalorder %v1618, 128
        %vm1689 = vmand %vm1687, %vm1688
        %1690 = vst.msk [vmem:[#allocation3] sm:$0x1] %vm1689, %v1685
        %1691 = vst [vmem:[#allocation1] sm:$0xff] %v1611
        %s1692 = scalar_lea.vmem [#allocation1], 5
        %v1693 = vld [vmem:[%s1692] ss:$9 sm:$0xff]
        %1695 = vst.msk [vmem:[#allocation3 + $0x1] sm:$0x1] %vm1621, %v1693
        %1696 = vst [vmem:[#allocation1] sm:$0xff] %v1611
        %s1697 = scalar_lea.vmem [#allocation1], 6
        %v1698 = vld [vmem:[%s1697] ss:$9 sm:$0xff]
        %1699 = vrot.lane.b32.xlu0 %v1698, 16
        %v1700 = vpop.permute.xlu0 %1699
        %1702 = vst.msk [vmem:[#allocation3 + $0x1] sm:$0x1] %vm1631, %v1700
        %1703 = vst [vmem:[#allocation1] sm:$0xff] %v1611
        %s1704 = scalar_lea.vmem [#allocation1], 7
        %v1705 = vld [vmem:[%s1704] ss:$9 sm:$0xff]
        %1706 = vrot.lane.b32.xlu0 %v1705, 32
        %v1707 = vpop.permute.xlu0 %1706
        %1709 = vst.msk [vmem:[#allocation3 + $0x1] sm:$0x1] %vm1641, %v1707
        %1711 = vrot.lane.b32.xlu0 %v1612, 48
        %v1712 = vpop.permute.xlu0 %1711
        %1714 = vst.msk [vmem:[#allocation3 + $0x1] sm:$0x1] %vm1649, %v1712
        %1715 = vst [vmem:[#allocation1] sm:$0xff] %v1612
        %s1716 = scalar_lea.vmem [#allocation1], 1
        %v1717 = vld [vmem:[%s1716] ss:$9 sm:$0xff]
        %1718 = vrot.lane.b32.xlu0 %v1717, 64
        %v1719 = vpop.permute.xlu0 %1718
        %1721 = vst.msk [vmem:[#allocation3 + $0x1] sm:$0x1] %vm1659, %v1719
        %1722 = vst [vmem:[#allocation1] sm:$0xff] %v1612
        %s1723 = scalar_lea.vmem [#allocation1], 2
        %v1724 = vld [vmem:[%s1723] ss:$9 sm:$0xff]
        %1725 = vrot.lane.b32.xlu0 %v1724, 80
        %v1726 = vpop.permute.xlu0 %1725
        %1728 = vst.msk [vmem:[#allocation3 + $0x1] sm:$0x1] %vm1669, %v1726
        %1729 = vst [vmem:[#allocation1] sm:$0xff] %v1612
        %s1730 = scalar_lea.vmem [#allocation1], 3
        %v1731 = vld [vmem:[%s1730] ss:$9 sm:$0xff]
        %1732 = vrot.lane.b32.xlu0 %v1731, 96
        %v1733 = vpop.permute.xlu0 %1732
        %1735 = vst.msk [vmem:[#allocation3 + $0x1] sm:$0x1] %vm1679, %v1733
        %1736 = vst [vmem:[#allocation1] sm:$0xff] %v1612
        %s1737 = scalar_lea.vmem [#allocation1], 4
        %v1738 = vld [vmem:[%s1737] ss:$9 sm:$0xff]
        %1739 = vrot.lane.b32.xlu0 %v1738, 112
        %v1740 = vpop.permute.xlu0 %1739
        %1742 = vst.msk [vmem:[#allocation3 + $0x1] sm:$0x1] %vm1689, %v1740
        %v1743 = vld [vmem:[%s169] sm:$0xff]
        %v1744 = vld [vmem:[#allocation3] sm:$0x3]
        %v1746 = vperm.slane %v1744, 0
        %v1747 = vperm.slane %v1744, 1
        %v1748 = vrot.slane %v1747, 4
        %v1749 = vsel %vm177, %v1746, %v1748
        %v1751 = vmul.f32 %v1743, %v1749
        %1752 = vst [vmem:[%s164] sm:$0xff] %v1751
        %s1753 = sand.u32 %s94, 1
        %s1754 = scalar_lea.sflag [#allocation6], %s1753
        %s1755 = sand.u32 %s94, 1
        %s1756 = smul.addr %s1755, 8
        %s1757 = scalar_lea.vmem [#allocation5], %s1756
        // Predicated region
        $region33: #{tpu_custom_call.1} parent=31 // pred_check
          %p1758 = pneg %p104
        $region34: #{tpu_custom_call.1} parent=31 // pred_check_branch
          %1760 = sbr.rel (%p1758) target = $region36
        $region35: #{tpu_custom_call.1} parent=31 // pred_region
          %1762 = vsyncadd %s1754, 0
          %s1763 = smul.addr %s18, 2
          %s1764 = smul.addr %s1763, 4
          %s1765 = scalar_lea.hbm %s3, %s1764
          %s1767 = sshll.u32 %s1757, 4
          %s1768 = int_to_ptr.vmem [resolvable:$true] %s1767
          %s1769 = sshll.u32 %s1765, 4
          %s1770 = int_to_ptr.hbm [resolvable:$true] %s1769
          %1772 = dma.vmem_to_hbm [thread:$0]  %s1768, 128, %s1770, %s1754
        $region36: #{tpu_custom_call.1} parent=31 // pred_fallthru
          _
      $region32: #{tpu_custom_call.1} parent=5 // pred_fallthru
        _
      %p1773 = scmp.le.s32.totalorder 2, %s13
      // Predicated region
      $region37: #{tpu_custom_call.1} parent=5 // pred_check
        %p1774 = pneg %p1773
      $region38: #{tpu_custom_call.1} parent=5 // pred_check_branch
        %1776 = sbr.rel (%p1774) target = $region40
      $region39: #{tpu_custom_call.1} parent=5 // pred_region
        %s1777 = ssub.s32 %s13, 2
        // Predicated region
        $region41: #{tpu_custom_call.1} parent=39 // pred_check
          %p1778 = pneg %p110
        $region42: #{tpu_custom_call.1} parent=39 // pred_check_branch
          %1780 = sbr.rel (%p1778) target = $region44
        $region43: #{tpu_custom_call.1} parent=39 // pred_region
          %s1781 = sand.u32 %s95, 1
          %s1782 = scalar_lea.sflag [#allocation6], %s1781
          %s1783 = sand.u32 %s95, 1
          %s1784 = smul.addr %s1783, 8
          %s1785 = scalar_lea.vmem [#allocation5], %s1784
          %1787 = dma.done %s1782, 128
        $region44: #{tpu_custom_call.1} parent=39 // pred_fallthru
          _
      $region40: #{tpu_custom_call.1} parent=5 // pred_fallthru
        _
    $region6: #{tpu_custom_call.1} parent=1 // loop_footer
      %s17 = sadd.s32 1, %s13
    $region7: #{tpu_custom_call.1} parent=1 // loop_footer_branch
      %12 = sbr.rel target = $region3
    $region8: #{tpu_custom_call.1} parent=1 // loop_exit
      _
    %1788 = vsyncpa [#allocation6], 1
    %s1789 = scalar_lea.sflag [#allocation6], 1
    %1790 = vsyncpa %s1789, 1

</llo_original>
